<compile_context>
chip_gen: v7x
topology: tpu7x:2x2x1
jax: 0.10.0
libtpu: 0.0.40
codegen_flags: <defaults>
</compile_context>

<pallas_src>
import jax
import jax.numpy as jnp
from jax.experimental import pallas as pl
from jax.experimental.pallas import tpu as pltpu

LANES = 128  # pad head output columns to a lane-dense width (unmasked vst)


# ---------------------------------------------------------------------------
# Small helpers (host-side planning / padding)
# ---------------------------------------------------------------------------
def _round_up(x, m):
    return -(-x // m) * m


def _pad_to(x, shape):
    pads = tuple((0, t - s) for s, t in zip(x.shape, shape))
    if all(p == (0, 0) for p in pads):
        return x
    return jnp.pad(x, pads)


def _pad_cols(w, n):
    """Zero-pad the last (column) axis of a [H, c] weight to [H, n]."""
    h, c = w.shape
    return jnp.pad(w, ((0, 0), (0, n - c)))


def _plan_batch(batch, pref_tb):
    """Pick (batch tile, padded batch):
       * tile is a multiple of 8 (sublane rule for (TB, H) blocks),
       * the parallel grid axis gets >= 2 steps (keeps both v7x TCs busy),
       * tile capped at `pref_tb` (MXU-height / footprint sweet spot)."""
    b_pad = max(_round_up(batch, 8), 16)
    tb = max(8, (min(pref_tb, b_pad // 2) // 8) * 8)
    return tb, _round_up(b_pad, tb)


def _plan_t5(batch, seq, hidden, *, pref_tb=64, buf_budget=8 << 20):
    """Batch/sequence tiling for the T5 head.  The hidden stream is the big
    operand; keep each [TB, TS, H] bf16 block <= ~8 MiB so double-buffering
    stays well inside v7x's 64 MiB VMEM (and v5e's small scoped default)."""
    tb, b_pad = _plan_batch(batch, pref_tb)
    if tb * seq * hidden * 2 <= buf_budget:
        return tb, b_pad, seq, seq                      # full S in one step
    # When tiling S, TS must be a multiple of 128 (mask block's lane dim).
    ts = max(128, (buf_budget // (tb * hidden * 2)) // 128 * 128)
    return tb, b_pad, ts, _round_up(seq, ts)


# ---------------------------------------------------------------------------
# Kernel 1: sequence-classifier head on the pre-sliced CLS row.
#   tanh(cls @ w_pool + b_pool) @ w_cls + b_cls   => [TB, LANES] (cols >= C are 0)
# ---------------------------------------------------------------------------
def _seq_cls_kernel(cls_ref, w_pool_ref, b_pool_ref, w_cls_ref, b_cls_ref, out_ref):
    pooled = jnp.tanh(
        jnp.dot(cls_ref[...], w_pool_ref[...], preferred_element_type=jnp.float32)
        + b_pool_ref[...]
    )                                                            # [TB, H] f32
    out_ref[...] = (
        jnp.dot(pooled.astype(jnp.bfloat16), w_cls_ref[...],
                preferred_element_type=jnp.float32)
        + b_cls_ref[...]
    )                                                            # [TB, LANES]


# ---------------------------------------------------------------------------
# Kernel 2: T5 first-decoding-step head (monot5 / rankt5 branches).
#   Per-token logits on the MXU as one [TB*TS, H] x [H, LANES] matmul, then a
#   masked sum over the sequence chunk, accumulated in f32 scratch.  The mean
#   divide happens once at the end (EUP approximate reciprocal, exact mask).
# ---------------------------------------------------------------------------
def _t5_head_kernel(h_ref, mask_ref, w_ref, out_ref, acc_ref, den_ref):
    s_idx = pl.program_id(1)

    @pl.when(s_idx == 0)
    def _():
        acc_ref[...] = jnp.zeros_like(acc_ref)
        den_ref[...] = jnp.zeros_like(den_ref)

    tb, ts, h = h_ref.shape
    # Single well-shaped MXU matmul (masking / mean commute with the linear
    # head, so pooling the logits is mathematically identical to pooling the
    # hidden states and avoids the batched-einsum / relayout path).
    logits = jnp.dot(h_ref[...].reshape(tb * ts, h), w_ref[...],
                     preferred_element_type=jnp.float32).reshape(tb, ts, -1)
    mask = mask_ref[...].astype(jnp.float32)                        # exact 0/1
    acc_ref[...] += jnp.sum(logits * mask[:, :, None], axis=1)      # [TB, LANES]
    den_ref[...] += jnp.sum(mask, axis=1, keepdims=True)            # [TB, 1]

    @pl.when(s_idx == pl.num_programs(1) - 1)
    def _():
        denom = jnp.maximum(den_ref[...], 1.0)
        out_ref[...] = acc_ref[...] * pl.reciprocal(denom, approx=True)


# ---------------------------------------------------------------------------
# Kernel 3: BGE head on the pre-gathered last non-padded hidden vectors.
#   last_h @ w  (w = [H,1] scalar-logit weight, zero-padded to LANES columns)
# ---------------------------------------------------------------------------
def _bge_head_kernel(lasth_ref, w_ref, out_ref):
    out_ref[...] = jnp.dot(lasth_ref[...], w_ref[...],
                           preferred_element_type=jnp.float32)       # [TB, LANES]


class RerankerModelPallas:
    """Pallas version of RerankerModel (scoring heads only).

    # TODO(synk): model.generate(), tokenizers, and the full pretrained backbones
    # (T5ForConditionalGeneration / AutoModelForSequenceClassification / layerwise
    # BGE decoder with cutoff_layers / compress_ratio / compress_layer) have no
    # clean Pallas equivalent; hidden states are synthesized deterministically
    # and only the score-head compute is implemented as Pallas kernels.
    """

    def __init__(self, model_name, *, batch_size=8, seq_len=16, hidden=128,
                 vocab=128, num_labels=2, seed=0):
        self.model_name = model_name.lower()
        if 'rankt5' in self.model_name:
            self.model_type = 'rankt5'
        elif 'monot5' in self.model_name:
            self.model_type = 'monot5'
        elif 'bge-reranker' in self.model_name:
            self.model_type = 'bge_reranker'
        else:
            self.model_type = 'sequence_classifier'

        self.B, self.S, self.H, self.V, self.C = batch_size, seq_len, hidden, vocab, num_labels
        # Real checkpoints use vocab ids 1176 / 6136 / 32089; fold them into the
        # small synthetic vocabulary used here.
        self.monot5_true_false_tokens = [1176 % vocab, 6136 % vocab]
        self.rankt5_extra_id_10 = 32089 % vocab

        keys = jax.random.split(jax.random.PRNGKey(seed), 5)
        s = 0.05
        # Embedding / weights stored in bf16 (halves DMA, MXU-native); biases f32.
        self.embedding = (s * jax.random.normal(keys[0], (vocab, hidden), jnp.float32)
                          ).astype(jnp.bfloat16)
        self.w_pool = (s * jax.random.normal(keys[1], (hidden, hidden), jnp.float32)
                       ).astype(jnp.bfloat16)
        self.b_pool = jnp.zeros((1, hidden), jnp.float32)
        w_cls = s * jax.random.normal(keys[2], (hidden, num_labels), jnp.float32)
        self.w_cls_pad = _pad_cols(w_cls, LANES).astype(jnp.bfloat16)      # [H, LANES]
        self.b_cls_pad = jnp.zeros((1, LANES), jnp.float32)
        lm_head = s * jax.random.normal(keys[3], (hidden, vocab), jnp.float32)  # [H, V]
        w_bge = s * jax.random.normal(keys[4], (hidden, 1), jnp.float32)
        self.w_bge_pad = _pad_cols(w_bge, LANES).astype(jnp.bfloat16)      # [H, LANES]

        # Gather only the lm_head columns actually needed (2 for monot5 as
        # [true, false], 1 for rankt5) — the full [H, V] projection is never
        # materialized in-kernel.
        if self.model_type == 'monot5':
            cols = jnp.array(self.monot5_true_false_tokens, dtype=jnp.int32)
        elif self.model_type == 'rankt5':
            cols = jnp.array([self.rankt5_extra_id_10], dtype=jnp.int32)
        else:
            cols = None
        self.w_t5_head = (None if cols is None else
                          _pad_cols(jnp.take(lm_head, cols, axis=1), LANES)
                          .astype(jnp.bfloat16))                           # [H, LANES]

        # Tiling plans: fixed tiles, batch (and S for T5) padded in the wrapper.
        self.TB_sm, self.Bp_sm = _plan_batch(batch_size, 256)              # cls / bge
        self.TB_t5, self.Bp_t5, self.TS, self.Sp = _plan_t5(batch_size, seq_len, hidden)

        self._single_buffer_consts = True
        self._build_calls()

    # ------------------------------------------------------------------ build
    def _build_calls(self):
        H = self.H
        tb_sm, bp_sm = self.TB_sm, self.Bp_sm
        tb_t5, bp_t5, ts, sp = self.TB_t5, self.Bp_t5, self.TS, self.Sp

        def const_spec(shape, index_map):
            # Constant operands (index_map returns the same block every step):
            # single-buffer them to recover VMEM (2x the weight footprint),
            # falling back to default double-buffering if unsupported.
            if self._single_buffer_consts:
                try:
                    return pl.BlockSpec(shape, index_map,
                                        pipeline_mode=pl.Buffered(buffer_count=1))
                except (TypeError, AttributeError):
                    pass
            return pl.BlockSpec(shape, index_map)

        params_1d = pltpu.CompilerParams(dimension_semantics=("parallel",))
        self._calls = {}

        self._calls['seq_cls'] = pl.pallas_call(
            _seq_cls_kernel,
            out_shape=jax.ShapeDtypeStruct((bp_sm, LANES), jnp.float32),
            grid=(bp_sm // tb_sm,),
            in_specs=[
                pl.BlockSpec((tb_sm, H), lambda b: (b, 0)),       # cls rows
                const_spec((H, H), lambda b: (0, 0)),             # w_pool
                const_spec((1, H), lambda b: (0, 0)),             # b_pool
                const_spec((H, LANES), lambda b: (0, 0)),         # w_cls (padded)
                const_spec((1, LANES), lambda b: (0, 0)),         # b_cls (padded)
            ],
            out_specs=pl.BlockSpec((tb_sm, LANES), lambda b: (b, 0)),
            compiler_params=params_1d,
        )

        self._calls['bge'] = pl.pallas_call(
            _bge_head_kernel,
            out_shape=jax.ShapeDtypeStruct((bp_sm, LANES), jnp.float32),
            grid=(bp_sm // tb_sm,),
            in_specs=[
                pl.BlockSpec((tb_sm, H), lambda b: (b, 0)),       # last-token hidden
                const_spec((H, LANES), lambda b: (0, 0)),         # w_bge (padded)
            ],
            out_specs=pl.BlockSpec((tb_sm, LANES), lambda b: (b, 0)),
            compiler_params=params_1d,
        )

        self._calls['t5'] = pl.pallas_call(
            _t5_head_kernel,
            out_shape=jax.ShapeDtypeStruct((bp_t5, LANES), jnp.float32),
            grid=(bp_t5 // tb_t5, sp // ts),                      # (batch, seq)
            in_specs=[
                pl.BlockSpec((tb_t5, ts, H), lambda b, s: (b, s, 0)),   # hidden chunk
                pl.BlockSpec((tb_t5, ts), lambda b, s: (b, s)),         # 0/1 mask (bf16)
                const_spec((H, LANES), lambda b, s: (0, 0)),            # lm_head cols
            ],
            out_specs=pl.BlockSpec((tb_t5, LANES), lambda b, s: (b, 0)),
            scratch_shapes=[pltpu.VMEM((tb_t5, LANES), jnp.float32),    # pooled-logit acc
                            pltpu.VMEM((tb_t5, 1), jnp.float32)],       # mask-count acc
            compiler_params=pltpu.CompilerParams(
                dimension_semantics=("parallel", "arbitrary"),
                # Explicit scoped-VMEM limit with headroom (fits v7x's 64 MiB).
                vmem_limit_bytes=48 * 1024 * 1024),
        )

    def _run(self, name, *args):
        try:
            return self._calls[name](*args)
        except Exception:
            if not self._single_buffer_consts:
                raise
            # pl.Buffered(1) single-buffering of constants not supported by this
            # jax/libtpu combo -> rebuild with default double-buffering, retry.
            self._single_buffer_consts = False
            self._build_calls()
            return self._calls[name](*args)

    # ---------------------------------------------------------------- forward
    def forward(self, batch):
        """Returns a [B] f32 device array of scores (no per-call host sync)."""
        batch = dict(batch)
        input_ids = jnp.asarray(batch['input_ids'])
        attn = jnp.asarray(batch['attention_mask'])
        # Synthetic "backbone": deterministic bf16 embedding lookup (glue).
        hidden = jnp.take(self.embedding, input_ids, axis=0)              # [B, S, H] bf16

        if self.model_type in ('monot5', 'rankt5'):
            hid = _pad_to(hidden, (self.Bp_t5, self.Sp, self.H))          # zero-pad B/S
            msk = _pad_to(attn.astype(jnp.bfloat16), (self.Bp_t5, self.Sp))
            head = self._run('t5', hid, msk, self.w_t5_head)[:self.B]     # [B, LANES]
            if self.model_type == 'monot5':
                log_probs = jax.nn.log_softmax(head[:, :2], axis=1)       # over [true, false]
                scores = log_probs[:, 0]
            else:  # rankt5
                scores = head[:, 0]
        elif self.model_type == 'bge_reranker':
            batch.pop('query_lengths', None)   # TODO(synk): cutoff_layers / compress_ratio /
            batch.pop('prompt_lengths', None)  # compress_layer of the BGE model not translated.
            # Last non-padded token (assumes right padding, as in the original);
            # clamp guards fully-padded rows (their scores are sliced away anyway).
            last_idx = jnp.maximum(jnp.sum(attn.astype(jnp.int32), axis=1) - 1, 0)   # [B]
            last_h = jnp.take_along_axis(
                hidden, last_idx[:, None, None], axis=1)[:, 0, :]         # [B, H] bf16
            last_h = _pad_to(last_h, (self.Bp_sm, self.H))
            scores = self._run('bge', last_h, self.w_bge_pad)[:self.B, 0]
        else:  # sequence_classifier
            cls = _pad_to(hidden[:, 0, :], (self.Bp_sm, self.H))          # [Bp, H] bf16
            logits = self._run('seq_cls', cls, self.w_pool, self.b_pool,
                               self.w_cls_pad, self.b_cls_pad)[:self.B, :self.C]
            if logits.shape[1] == 1:
                scores = jnp.squeeze(logits, axis=1)
            else:
                scores = logits[:, 0]

        return scores


if __name__ == "__main__":
    B, S, H, V, C = 8, 16, 128, 128, 2
    key = jax.random.PRNGKey(0)
    k_ids, k_len = jax.random.split(key)
    input_ids = jax.random.randint(k_ids, (B, S), 0, V, dtype=jnp.int32)
    lengths = jax.random.randint(k_len, (B,), 4, S + 1, dtype=jnp.int32)
    attention_mask = (jnp.arange(S)[None, :] < lengths[:, None]).astype(jnp.int32)
    batch = {'input_ids': input_ids, 'attention_mask': attention_mask}

    model_names = [
        'castorini/monot5-base-msmarco',          # monot5 branch
        'Soyoung97/RankT5-base',                  # rankt5 branch
        'BAAI/bge-reranker-v2-minicpm-layerwise', # bge_reranker branch
        'cross-encoder/ms-marco-MiniLM-L-6-v2',   # sequence_classifier branch
    ]
    for name in model_names:
        model = RerankerModelPallas(name, batch_size=B, seq_len=S, hidden=H,
                                    vocab=V, num_labels=C)
        b = dict(batch)
        if model.model_type == 'bge_reranker':
            b['query_lengths'] = [4] * B
            b['prompt_lengths'] = [3] * B
        scores = jax.block_until_ready(model.forward(b))
        assert scores.shape == (B,)
        assert bool(jnp.all(jnp.isfinite(scores)))

    print("KERNEL_OK")
</pallas_src>

<mosaic_0001>
module attributes {stable_mosaic.version = 11 : i64} {
  func.func @_t5_head_kernel(%arg0: i32, %arg1: i32, %arg2: memref<8x16x128xbf16, #tpu.memory_space<vmem>>, %arg3: memref<8x16xbf16, #tpu.memory_space<vmem>>, %arg4: memref<128x128xbf16, #tpu.memory_space<vmem>>, %arg5: memref<8x128xf32, #tpu.memory_space<vmem>>, %arg6: memref<8x128xf32, #tpu.memory_space<vmem>>, %arg7: memref<8x1xf32, #tpu.memory_space<vmem>>) attributes {dimension_semantics = [#tpu.dimension_semantics<parallel>, #tpu.dimension_semantics<arbitrary>], iteration_bounds = array<i64: 2, 1>, scalar_prefetch = 0 : i64, scratch_operands = 2 : i64, tpu.core_type = #tpu.core_type<tc>, window_params = [{transform_indices = @transform_0, window_bounds = array<i64: 8, 16, 128>}, {transform_indices = @transform_1, window_bounds = array<i64: 8, 16>}, {pipeline_mode = #tpu.pipeline_mode<synchronous>, transform_indices = @transform_2, window_bounds = array<i64: 128, 128>}, {transform_indices = @transform_3, window_bounds = array<i64: 8, 128>}]} {
    %c0_i32 = arith.constant 0 : i32
    %0 = arith.cmpi eq, %arg1, %c0_i32 : i32
    %1 = arith.extui %0 : i1 to i32
    %c0_i32_0 = arith.constant 0 : i32
    %2 = arith.cmpi ne, %1, %c0_i32_0 : i32
    scf.if %2 {
      %cst_19 = arith.constant 0.000000e+00 : f32
      %25 = vector.broadcast %cst_19 : f32 to vector<8x128xf32>
      %c0_20 = arith.constant 0 : index
      %c0_21 = arith.constant 0 : index
      %26 = vector.load %arg6[%c0_20, %c0_21] : memref<8x128xf32, #tpu.memory_space<vmem>>, vector<8x128xf32>
      tpu.vector_store %arg6[%c0_20, %c0_21], %25 {strides = array<i32>} : memref<8x128xf32, #tpu.memory_space<vmem>>, vector<8x128xf32>,
      %cst_22 = arith.constant 0.000000e+00 : f32
      %27 = vector.broadcast %cst_22 : f32 to vector<8x1xf32>
      %c0_23 = arith.constant 0 : index
      %c0_24 = arith.constant 0 : index
      %28 = vector.load %arg7[%c0_23, %c0_24] : memref<8x1xf32, #tpu.memory_space<vmem>>, vector<8x1xf32>
      tpu.vector_store %arg7[%c0_23, %c0_24], %27 {strides = array<i32>} : memref<8x1xf32, #tpu.memory_space<vmem>>, vector<8x1xf32>,
    } else {
    }
    %c0 = arith.constant 0 : index
    %c0_1 = arith.constant 0 : index
    %c0_2 = arith.constant 0 : index
    %3 = vector.load %arg2[%c0, %c0_1, %c0_2] : memref<8x16x128xbf16, #tpu.memory_space<vmem>>, vector<8x16x128xbf16>
    %4 = vector.shape_cast %3 : vector<8x16x128xbf16> to vector<128x128xbf16>
    %c0_3 = arith.constant 0 : index
    %c0_4 = arith.constant 0 : index
    %5 = vector.load %arg4[%c0_3, %c0_4] : memref<128x128xbf16, #tpu.memory_space<vmem>>, vector<128x128xbf16>
    %cst = arith.constant dense<0.000000e+00> : vector<128x128xf32>
    %6 = tpu.matmul %4, %5, %cst {dimension_numbers = #tpu.dot_dimension_numbers<[1], [0], [0], [1], [0, 0, 1, 1], [], []>} : vector<128x128xbf16>, vector<128x128xbf16>, vector<128x128xf32> -> vector<128x128xf32>
    %7 = vector.shape_cast %6 : vector<128x128xf32> to vector<8x16x128xf32>
    %c0_5 = arith.constant 0 : index
    %c0_6 = arith.constant 0 : index
    %8 = vector.load %arg3[%c0_5, %c0_6] : memref<8x16xbf16, #tpu.memory_space<vmem>>, vector<8x16xbf16>
    %9 = arith.extf %8 : vector<8x16xbf16> to vector<8x16xf32>
    %c0_7 = arith.constant 0 : index
    %c0_8 = arith.constant 0 : index
    %10 = vector.load %arg6[%c0_7, %c0_8] : memref<8x128xf32, #tpu.memory_space<vmem>>, vector<8x128xf32>
    %11 = vector.shape_cast %9 : vector<8x16xf32> to vector<8x16x1xf32>
    %12 = vector.broadcast %11 : vector<8x16x1xf32> to vector<8x16x128xf32>
    %13 = arith.mulf %7, %12 : vector<8x16x128xf32>
    %cst_9 = arith.constant dense<0.000000e+00> : vector<8x128xf32>
    %14 = vector.multi_reduction <add>, %13, %cst_9 [1] : vector<8x16x128xf32> to vector<8x128xf32>
    %15 = arith.addf %10, %14 : vector<8x128xf32>
    %c0_10 = arith.constant 0 : index
    %c0_11 = arith.constant 0 : index
    %16 = vector.load %arg6[%c0_10, %c0_11] : memref<8x128xf32, #tpu.memory_space<vmem>>, vector<8x128xf32>
    tpu.vector_store %arg6[%c0_10, %c0_11], %15 {strides = array<i32>} : memref<8x128xf32, #tpu.memory_space<vmem>>, vector<8x128xf32>,
    %c0_12 = arith.constant 0 : index
    %c0_13 = arith.constant 0 : index
    %17 = vector.load %arg7[%c0_12, %c0_13] : memref<8x1xf32, #tpu.memory_space<vmem>>, vector<8x1xf32>
    %cst_14 = arith.constant dense<0.000000e+00> : vector<8xf32>
    %18 = vector.multi_reduction <add>, %9, %cst_14 [1] : vector<8x16xf32> to vector<8xf32>
    %19 = vector.shape_cast %18 : vector<8xf32> to vector<8x1xf32>
    %20 = arith.addf %17, %19 : vector<8x1xf32>
    %c0_15 = arith.constant 0 : index
    %c0_16 = arith.constant 0 : index
    %21 = vector.load %arg7[%c0_15, %c0_16] : memref<8x1xf32, #tpu.memory_space<vmem>>, vector<8x1xf32>
    tpu.vector_store %arg7[%c0_15, %c0_16], %20 {strides = array<i32>} : memref<8x1xf32, #tpu.memory_space<vmem>>, vector<8x1xf32>,
    %c0_i32_17 = arith.constant 0 : i32
    %22 = arith.cmpi eq, %arg1, %c0_i32_17 : i32
    %23 = arith.extui %22 : i1 to i32
    %c0_i32_18 = arith.constant 0 : i32
    %24 = arith.cmpi ne, %23, %c0_i32_18 : i32
    scf.if %24 {
      %c0_19 = arith.constant 0 : index
      %c0_20 = arith.constant 0 : index
      %25 = vector.load %arg7[%c0_19, %c0_20] : memref<8x1xf32, #tpu.memory_space<vmem>>, vector<8x1xf32>
      %cst_21 = arith.constant 1.000000e+00 : f32
      %26 = vector.broadcast %cst_21 : f32 to vector<8x1xf32>
      %27 = arith.maximumf %25, %26 : vector<8x1xf32>
      %c0_22 = arith.constant 0 : index
      %c0_23 = arith.constant 0 : index
      %28 = vector.load %arg6[%c0_22, %c0_23] : memref<8x128xf32, #tpu.memory_space<vmem>>, vector<8x128xf32>
      %29 = tpu.reciprocal %27 {approx = true} : vector<8x1xf32> -> vector<8x1xf32>
      %30 = vector.broadcast %29 : vector<8x1xf32> to vector<8x128xf32>
      %31 = arith.mulf %28, %30 : vector<8x128xf32>
      %c0_24 = arith.constant 0 : index
      %c0_25 = arith.constant 0 : index
      %32 = vector.load %arg5[%c0_24, %c0_25] : memref<8x128xf32, #tpu.memory_space<vmem>>, vector<8x128xf32>
      tpu.vector_store %arg5[%c0_24, %c0_25], %31 {strides = array<i32>} : memref<8x128xf32, #tpu.memory_space<vmem>>, vector<8x128xf32>,
    } else {
    }
    return
  }
  func.func @transform_0(%arg0: i32, %arg1: i32) -> (i32, i32, i32) {
    %c0_i32 = arith.constant 0 : i32
    %c0_i32_0 = arith.constant 0 : i32
    return %arg0, %arg1, %c0_i32 : i32, i32, i32
  }
  func.func @transform_1(%arg0: i32, %arg1: i32) -> (i32, i32) {
    %c0_i32 = arith.constant 0 : i32
    return %arg0, %arg1 : i32, i32
  }
  func.func @transform_2(%arg0: i32, %arg1: i32) -> (i32, i32) {
    %c0_i32 = arith.constant 0 : i32
    %c0_i32_0 = arith.constant 0 : i32
    %c0_i32_1 = arith.constant 0 : i32
    return %c0_i32, %c0_i32_0 : i32, i32
  }
  func.func @transform_3(%arg0: i32, %arg1: i32) -> (i32, i32) {
    %c0_i32 = arith.constant 0 : i32
    %c0_i32_0 = arith.constant 0 : i32
    return %arg0, %c0_i32 : i32, i32
  }
}

module attributes {stable_mosaic.version = 11 : i64} {
  func.func @_t5_head_kernel(%arg0: i32, %arg1: i32, %arg2: memref<8x16x128xbf16, #tpu.memory_space<vmem>>, %arg3: memref<8x16xbf16, #tpu.memory_space<vmem>>, %arg4: memref<128x128xbf16, #tpu.memory_space<vmem>>, %arg5: memref<8x128xf32, #tpu.memory_space<vmem>>, %arg6: memref<8x128xf32, #tpu.memory_space<vmem>>, %arg7: memref<8x1xf32, #tpu.memory_space<vmem>>) attributes {dimension_semantics = [#tpu.dimension_semantics<parallel>, #tpu.dimension_semantics<arbitrary>], iteration_bounds = array<i64: 2, 1>, scalar_prefetch = 0 : i64, scratch_operands = 2 : i64, tpu.core_type = #tpu.core_type<tc>, window_params = [{transform_indices = @transform_0, window_bounds = array<i64: 8, 16, 128>}, {transform_indices = @transform_1, window_bounds = array<i64: 8, 16>}, {pipeline_mode = #tpu.pipeline_mode<synchronous>, transform_indices = @transform_2, window_bounds = array<i64: 128, 128>}, {transform_indices = @transform_3, window_bounds = array<i64: 8, 128>}]} {
    %c0_i32 = arith.constant 0 : i32
    %0 = arith.cmpi eq, %arg1, %c0_i32 : i32
    %1 = arith.extui %0 : i1 to i32
    %c0_i32_0 = arith.constant 0 : i32
    %2 = arith.cmpi ne, %1, %c0_i32_0 : i32
    scf.if %2 {
      %cst_19 = arith.constant 0.000000e+00 : f32
      %25 = vector.broadcast %cst_19 : f32 to vector<8x128xf32>
      %c0_20 = arith.constant 0 : index
      %c0_21 = arith.constant 0 : index
      %26 = vector.load %arg6[%c0_20, %c0_21] : memref<8x128xf32, #tpu.memory_space<vmem>>, vector<8x128xf32>
      tpu.vector_store %arg6[%c0_20, %c0_21], %25 {strides = array<i32>} : memref<8x128xf32, #tpu.memory_space<vmem>>, vector<8x128xf32>,
      %cst_22 = arith.constant 0.000000e+00 : f32
      %27 = vector.broadcast %cst_22 : f32 to vector<8x1xf32>
      %c0_23 = arith.constant 0 : index
      %c0_24 = arith.constant 0 : index
      %28 = vector.load %arg7[%c0_23, %c0_24] : memref<8x1xf32, #tpu.memory_space<vmem>>, vector<8x1xf32>
      tpu.vector_store %arg7[%c0_23, %c0_24], %27 {strides = array<i32>} : memref<8x1xf32, #tpu.memory_space<vmem>>, vector<8x1xf32>,
    } else {
    }
    %c0 = arith.constant 0 : index
    %c0_1 = arith.constant 0 : index
    %c0_2 = arith.constant 0 : index
    %3 = vector.load %arg2[%c0, %c0_1, %c0_2] : memref<8x16x128xbf16, #tpu.memory_space<vmem>>, vector<8x16x128xbf16>
    %4 = vector.shape_cast %3 : vector<8x16x128xbf16> to vector<128x128xbf16>
    %c0_3 = arith.constant 0 : index
    %c0_4 = arith.constant 0 : index
    %5 = vector.load %arg4[%c0_3, %c0_4] : memref<128x128xbf16, #tpu.memory_space<vmem>>, vector<128x128xbf16>
    %cst = arith.constant dense<0.000000e+00> : vector<128x128xf32>
    %6 = tpu.matmul %4, %5, %cst {dimension_numbers = #tpu.dot_dimension_numbers<[1], [0], [0], [1], [0, 0, 1, 1], [], []>} : vector<128x128xbf16>, vector<128x128xbf16>, vector<128x128xf32> -> vector<128x128xf32>
    %7 = vector.shape_cast %6 : vector<128x128xf32> to vector<8x16x128xf32>
    %c0_5 = arith.constant 0 : index
    %c0_6 = arith.constant 0 : index
    %8 = vector.load %arg3[%c0_5, %c0_6] : memref<8x16xbf16, #tpu.memory_space<vmem>>, vector<8x16xbf16>
    %9 = arith.extf %8 : vector<8x16xbf16> to vector<8x16xf32>
    %c0_7 = arith.constant 0 : index
    %c0_8 = arith.constant 0 : index
    %10 = vector.load %arg6[%c0_7, %c0_8] : memref<8x128xf32, #tpu.memory_space<vmem>>, vector<8x128xf32>
    %11 = vector.shape_cast %9 : vector<8x16xf32> to vector<8x16x1xf32>
    %12 = vector.broadcast %11 : vector<8x16x1xf32> to vector<8x16x128xf32>
    %13 = arith.mulf %7, %12 : vector<8x16x128xf32>
    %cst_9 = arith.constant dense<0.000000e+00> : vector<8x128xf32>
    %14 = vector.multi_reduction <add>, %13, %cst_9 [1] : vector<8x16x128xf32> to vector<8x128xf32>
    %15 = arith.addf %10, %14 : vector<8x128xf32>
    %c0_10 = arith.constant 0 : index
    %c0_11 = arith.constant 0 : index
    %16 = vector.load %arg6[%c0_10, %c0_11] : memref<8x128xf32, #tpu.memory_space<vmem>>, vector<8x128xf32>
    tpu.vector_store %arg6[%c0_10, %c0_11], %15 {strides = array<i32>} : memref<8x128xf32, #tpu.memory_space<vmem>>, vector<8x128xf32>,
    %c0_12 = arith.constant 0 : index
    %c0_13 = arith.constant 0 : index
    %17 = vector.load %arg7[%c0_12, %c0_13] : memref<8x1xf32, #tpu.memory_space<vmem>>, vector<8x1xf32>
    %cst_14 = arith.constant dense<0.000000e+00> : vector<8xf32>
    %18 = vector.multi_reduction <add>, %9, %cst_14 [1] : vector<8x16xf32> to vector<8xf32>
    %19 = vector.shape_cast %18 : vector<8xf32> to vector<8x1xf32>
    %20 = arith.addf %17, %19 : vector<8x1xf32>
    %c0_15 = arith.constant 0 : index
    %c0_16 = arith.constant 0 : index
    %21 = vector.load %arg7[%c0_15, %c0_16] : memref<8x1xf32, #tpu.memory_space<vmem>>, vector<8x1xf32>
    tpu.vector_store %arg7[%c0_15, %c0_16], %20 {strides = array<i32>} : memref<8x1xf32, #tpu.memory_space<vmem>>, vector<8x1xf32>,
    %c0_i32_17 = arith.constant 0 : i32
    %22 = arith.cmpi eq, %arg1, %c0_i32_17 : i32
    %23 = arith.extui %22 : i1 to i32
    %c0_i32_18 = arith.constant 0 : i32
    %24 = arith.cmpi ne, %23, %c0_i32_18 : i32
    scf.if %24 {
      %c0_19 = arith.constant 0 : index
      %c0_20 = arith.constant 0 : index
      %25 = vector.load %arg7[%c0_19, %c0_20] : memref<8x1xf32, #tpu.memory_space<vmem>>, vector<8x1xf32>
      %cst_21 = arith.constant 1.000000e+00 : f32
      %26 = vector.broadcast %cst_21 : f32 to vector<8x1xf32>
      %27 = arith.maximumf %25, %26 : vector<8x1xf32>
      %c0_22 = arith.constant 0 : index
      %c0_23 = arith.constant 0 : index
      %28 = vector.load %arg6[%c0_22, %c0_23] : memref<8x128xf32, #tpu.memory_space<vmem>>, vector<8x128xf32>
      %29 = tpu.reciprocal %27 {approx = true} : vector<8x1xf32> -> vector<8x1xf32>
      %30 = vector.broadcast %29 : vector<8x1xf32> to vector<8x128xf32>
      %31 = arith.mulf %28, %30 : vector<8x128xf32>
      %c0_24 = arith.constant 0 : index
      %c0_25 = arith.constant 0 : index
      %32 = vector.load %arg5[%c0_24, %c0_25] : memref<8x128xf32, #tpu.memory_space<vmem>>, vector<8x128xf32>
      tpu.vector_store %arg5[%c0_24, %c0_25], %31 {strides = array<i32>} : memref<8x128xf32, #tpu.memory_space<vmem>>, vector<8x128xf32>,
    } else {
    }
    return
  }
  func.func @transform_0(%arg0: i32, %arg1: i32) -> (i32, i32, i32) {
    %c0_i32 = arith.constant 0 : i32
    %c0_i32_0 = arith.constant 0 : i32
    return %arg0, %arg1, %c0_i32 : i32, i32, i32
  }
  func.func @transform_1(%arg0: i32, %arg1: i32) -> (i32, i32) {
    %c0_i32 = arith.constant 0 : i32
    return %arg0, %arg1 : i32, i32
  }
  func.func @transform_2(%arg0: i32, %arg1: i32) -> (i32, i32) {
    %c0_i32 = arith.constant 0 : i32
    %c0_i32_0 = arith.constant 0 : i32
    %c0_i32_1 = arith.constant 0 : i32
    return %c0_i32, %c0_i32_0 : i32, i32
  }
  func.func @transform_3(%arg0: i32, %arg1: i32) -> (i32, i32) {
    %c0_i32 = arith.constant 0 : i32
    %c0_i32_0 = arith.constant 0 : i32
    return %arg0, %c0_i32 : i32, i32
  }
}

</mosaic_0001>

<llo_original>
// kernel: tpu_custom_call.1
$region0: #{tpu_custom_call.1}
  #allocation0 [shape = 'u32[]', space=smem, size = 0x4, offset = 0x4, fixed_abs, tag = 'smem constant byte address 0x4 - core index']
  #allocation1 [shape = 'u32[144,128]{1,0:T(1,128)}', space=vmem, size = 0x12000, scoped, tag = 'internal scratch']
  #allocation2 [shape = 'f32[8,128]{1,0:T(8,128)}', space=vmem, size = 0x1000, scoped, tag = 'scratch operand']
  #allocation3 [shape = 'f32[8,1]{1,0:T(8,128)}', space=vmem, size = 0x1000, scoped, tag = 'scratch operand']
  %s0 = inlined_call_operand.hbm [shape: bf16[16,16,128], index: 0, kind: input, shape index: {}]
  %s1 = inlined_call_operand.hbm [shape: bf16[16,16], index: 1, kind: input, shape index: {}]
  %s2 = inlined_call_operand.hbm [shape: bf16[128,128], index: 2, kind: input, shape index: {}]
  %s3 = inlined_call_operand.hbm [shape: f32[16,128], index: 3, kind: output, shape index: {}]
  %s4 = sld [smem:[#allocation0]]
  $region65: #{tpu_custom_call.1} parent=0
    _
  %s6 = ssub.s32 1, %s4
  %s7 = scalar_select 0, %s6, %s4
  $region1: #{tpu_custom_call.1} parent=0
    #allocation4 [shape = 'u8[65536]{0}', space=vmem, size = 0x10000, scoped, tag = 'input window, operand 0']
    #allocation5 [shape = 's32[2]{0}', space=sflag, size = 0x8, scoped, tag = 'scoped memory for tpu_custom_call.1']
    #allocation6 [shape = 's32[2]{0}', space=sflag, size = 0x8, scoped, tag = 'scoped memory for tpu_custom_call.1']
    #allocation7 [shape = 'u8[4096]{0}', space=vmem, size = 0x1000, scoped, tag = 'input window, operand 1']
    #allocation8 [shape = 's32[2]{0}', space=sflag, size = 0x8, scoped, tag = 'scoped memory for tpu_custom_call.1']
    #allocation9 [shape = 'u8[32768]{0}', space=vmem, size = 0x8000, scoped, tag = 'input window, operand 2, single buffered']
    #allocation10 [shape = 'u8[8192]{0}', space=vmem, size = 0x2000, scoped, tag = 'output window, operand 0']
    %8 = vsyncpa [#allocation5], 0
    %s9 = scalar_lea.sflag [#allocation5], 1
    %10 = vsyncpa %s9, 0
    %11 = vsyncpa [#allocation8], 0
    %s12 = scalar_lea.sflag [#allocation8], 1
    %13 = vsyncpa %s12, 0
    %14 = vsyncpa [#allocation6], 0
    %s15 = scalar_lea.sflag [#allocation6], 1
    %16 = vsyncpa %s15, 0
    loop: start=0, step=1, limit=4
    $region2: #{tpu_custom_call.1} parent=1 // loop_pre_header
      _
    $region3: #{tpu_custom_call.1} parent=1 // loop_header
      %s18 = sphi 0, %s22
      %p19 = scmp.ge.s32.totalorder %s18, 4
      %s25 = sphi 0, %s37
      %s26 = sphi 0, %s33
      %s27 = sphi 0, %s25
      %s28 = sphi 0, %s26
      %s29 = sphi 0, %s27
      %s30 = sphi 0, %s28
      %s42 = sphi 0, %s44
      %s45 = sphi 0, %s42
      %s46 = sphi 0, %s45
      %s62 = sphi 0, %s46
      %s70 = sphi 0, %s72
      %s73 = sphi 0, %s70
      %s74 = sphi 0, %s73
      %s90 = sphi 0, %s74
      %s94 = sphi 0, %s94
      %s96 = sphi 0, %s94
      %s97 = sphi 0, %s96
      %s111 = sphi 0, %s97
      %s117 = sphi 0, %s119
      %s120 = sphi 0, %s117
      %s121 = sphi 0, %s120
      %s137 = sphi 0, %s121
    $region4: #{tpu_custom_call.1} parent=1 // loop_header_branch
      %21 = sbr.rel (%p19) target = $region8
    $region5: #{tpu_custom_call.1} parent=1 // loop_body
      %s23 = ssub.s32 %s18, 1
      %s24 = ssub.s32 %s18, 2
      %s31 = sadd.s32 1, %s26
      %p32 = scmp.ge.s32.totalorder %s31, 1
      %s33 = scalar_select %p32, 0, %s31
      %s34 = sadd.s32 1, %s25
      %s35 = scalar_select %p32, %s34, %s25
      %p36 = scmp.ge.s32.totalorder %s35, 2
      %s37 = scalar_select %p36, 0, %s35
      %s38 = ssub.s32 %s25, %s37
      %s39 = ssub.s32 %s26, %s33
      %s40 = sor.u32 %s38, %s39
      %p41 = scmp.eq.s32.totalorder %s40, 0
      %s43 = sadd.s32 %s42, 1
      %s44 = scalar_select %p41, %s42, %s43
      %p47 = pneg %p41
      %p48 = scmp.eq.s32.totalorder %s18, 1
      %p49 = por %p47, %p48
      %p50 = scmp.ne.s32.totalorder %s42, %s45
      %p51 = scmp.eq.s32.totalorder %s18, 0
      %p52 = por %p50, %p51
      %p53 = scmp.ne.s32.totalorder %s42, %s45
      %p54 = scmp.eq.s32.totalorder %s23, 1
      %p55 = por %p53, %p54
      %p56 = scmp.ne.s32.totalorder %s45, %s46
      %p57 = scmp.eq.s32.totalorder %s23, 0
      %p58 = por %p56, %p57
      %p59 = scmp.ne.s32.totalorder %s45, %s46
      %p60 = scmp.eq.s32.totalorder %s24, 1
      %p61 = por %p59, %p60
      %p63 = scmp.ne.s32.totalorder %s46, %s62
      %p64 = scmp.eq.s32.totalorder %s24, 0
      %p65 = por %p63, %p64
      %s66 = ssub.s32 %s25, %s37
      %s67 = ssub.s32 %s26, %s33
      %s68 = sor.u32 %s66, %s67
      %p69 = scmp.eq.s32.totalorder %s68, 0
      %s71 = sadd.s32 %s70, 1
      %s72 = scalar_select %p69, %s70, %s71
      %p75 = pneg %p69
      %p76 = scmp.eq.s32.totalorder %s18, 1
      %p77 = por %p75, %p76
      %p78 = scmp.ne.s32.totalorder %s70, %s73
      %p79 = scmp.eq.s32.totalorder %s18, 0
      %p80 = por %p78, %p79
      %p81 = scmp.ne.s32.totalorder %s70, %s73
      %p82 = scmp.eq.s32.totalorder %s23, 1
      %p83 = por %p81, %p82
      %p84 = scmp.ne.s32.totalorder %s73, %s74
      %p85 = scmp.eq.s32.totalorder %s23, 0
      %p86 = por %p84, %p85
      %p87 = scmp.ne.s32.totalorder %s73, %s74
      %p88 = scmp.eq.s32.totalorder %s24, 1
      %p89 = por %p87, %p88
      %p91 = scmp.ne.s32.totalorder %s74, %s90
      %p92 = scmp.eq.s32.totalorder %s24, 0
      %p93 = por %p91, %p92
      %s95 = sadd.s32 %s94, 1
      %p98 = scmp.eq.s32.totalorder %s18, 1
      %p99 = scmp.ne.s32.totalorder %s94, %s96
      %p100 = scmp.eq.s32.totalorder %s18, 0
      %p101 = por %p99, %p100
      %p102 = scmp.ne.s32.totalorder %s94, %s96
      %p103 = scmp.eq.s32.totalorder %s23, 1
      %p104 = por %p102, %p103
      %p105 = scmp.ne.s32.totalorder %s96, %s97
      %p106 = scmp.eq.s32.totalorder %s23, 0
      %p107 = por %p105, %p106
      %p108 = scmp.ne.s32.totalorder %s96, %s97
      %p109 = scmp.eq.s32.totalorder %s24, 1
      %p110 = por %p108, %p109
      %p112 = scmp.ne.s32.totalorder %s97, %s111
      %p113 = scmp.eq.s32.totalorder %s24, 0
      %p114 = por %p112, %p113
      %s115 = ssub.s32 %s25, %s37
      %p116 = scmp.eq.s32.totalorder %s115, 0
      %s118 = sadd.s32 %s117, 1
      %s119 = scalar_select %p116, %s117, %s118
      %p122 = pneg %p116
      %p123 = scmp.eq.s32.totalorder %s18, 1
      %p124 = por %p122, %p123
      %p125 = scmp.ne.s32.totalorder %s117, %s120
      %p126 = scmp.eq.s32.totalorder %s18, 0
      %p127 = por %p125, %p126
      %p128 = scmp.ne.s32.totalorder %s117, %s120
      %p129 = scmp.eq.s32.totalorder %s23, 1
      %p130 = por %p128, %p129
      %p131 = scmp.ne.s32.totalorder %s120, %s121
      %p132 = scmp.eq.s32.totalorder %s23, 0
      %p133 = por %p131, %p132
      %p134 = scmp.ne.s32.totalorder %s120, %s121
      %p135 = scmp.eq.s32.totalorder %s24, 1
      %p136 = por %p134, %p135
      %p138 = scmp.ne.s32.totalorder %s121, %s137
      %p139 = scmp.eq.s32.totalorder %s24, 0
      %p140 = por %p138, %p139
      %p141 = scmp.le.s32.totalorder 1, %s18
      %p142 = scmp.lt.s32.totalorder %s18, 3
      %p143 = pnand %p141, %p142
      %p144 = pneg %p143
      // Predicated region
      $region9: #{tpu_custom_call.1} parent=5 // pred_check
        _
      $region10: #{tpu_custom_call.1} parent=5 // pred_check_branch
        %146 = sbr.rel (%p143) target = $region12
      $region11: #{tpu_custom_call.1} parent=5 // pred_region
        %s147 = ssub.s32 %s18, 1
        // Predicated region
        $region13: #{tpu_custom_call.1} parent=11 // pred_check
          %p148 = pneg %p107
        $region14: #{tpu_custom_call.1} parent=11 // pred_check_branch
          %150 = sbr.rel (%p148) target = $region16
        $region15: #{tpu_custom_call.1} parent=11 // pred_region
          %s152 = ssub.s32 1024, 1024
          %153 = vsyncadd [#allocation8], %s152
          %s154 = sshll.u32 [#allocation9], 4
          %s155 = int_to_ptr.vmem [resolvable:$true] %s154
          %160 = dma.hbm_to_vmem [thread:$0]  %s2, 1024, %s155, [#allocation8], 64, 64, 4
        $region16: #{tpu_custom_call.1} parent=11 // pred_fallthru
          _
      $region12: #{tpu_custom_call.1} parent=5 // pred_fallthru
        _
      %p161 = scmp.lt.s32.totalorder %s18, 2
      // Predicated region
      $region17: #{tpu_custom_call.1} parent=5 // pred_check
        %p162 = pneg %p161
      $region18: #{tpu_custom_call.1} parent=5 // pred_check_branch
        %164 = sbr.rel (%p162) target = $region20
      $region19: #{tpu_custom_call.1} parent=5 // pred_region
        // Predicated region
        $region21: #{tpu_custom_call.1} parent=19 // pred_check
          %p165 = pneg %p52
        $region22: #{tpu_custom_call.1} parent=19 // pred_check_branch
          %167 = sbr.rel (%p165) target = $region24
        $region23: #{tpu_custom_call.1} parent=19 // pred_region
          %s168 = sand.u32 %s42, 1
          %s169 = scalar_lea.sflag [#allocation5], %s168
          %s170 = sand.u32 %s42, 1
          %s171 = smul.addr %s170, 64
          %s172 = scalar_lea.vmem [#allocation4], %s171
          %s173 = smul.u32 8, %s25
          %s174 = smul.u32 2, %s26
          %s176 = ssub.s32 1024, 1024
          %177 = vsyncadd %s169, %s176
          %s178 = smul.addr %s173, 2
          %s179 = sadd.s32 %s174, %s178
          %s180 = smul.addr %s179, 64
          %s181 = scalar_lea.hbm %s0, %s180
          %s182 = sshll.u32 %s172, 4
          %s183 = int_to_ptr.vmem [resolvable:$true] %s182
          %188 = dma.hbm_to_vmem [thread:$0]  %s181, 1024, %s183, %s169, 64, 64, 4
        $region24: #{tpu_custom_call.1} parent=19 // pred_fallthru
          _
        // Predicated region
        $region25: #{tpu_custom_call.1} parent=19 // pred_check
          %p189 = pneg %p80
        $region26: #{tpu_custom_call.1} parent=19 // pred_check_branch
          %191 = sbr.rel (%p189) target = $region28
        $region27: #{tpu_custom_call.1} parent=19 // pred_region
          %s192 = sand.u32 %s18, 1
          %s193 = scalar_lea.sflag [#allocation8], %s192
          %s194 = sand.u32 %s70, 1
          %s195 = smul.addr %s194, 4
          %s196 = scalar_lea.vmem [#allocation7], %s195
          %s198 = ssub.s32 64, 64
          %199 = vsyncadd %s193, %s198
          %s200 = sadd.s32 %s26, %s25
          %s201 = smul.addr %s200, 64
          %s202 = scalar_lea.hbm %s1, %s201
          %s204 = sshll.u32 %s196, 4
          %s205 = int_to_ptr.vmem [resolvable:$true] %s204
          %207 = dma.hbm_to_vmem [thread:$0]  %s202, 64, %s205, %s193
        $region28: #{tpu_custom_call.1} parent=19 // pred_fallthru
          _
      $region20: #{tpu_custom_call.1} parent=5 // pred_fallthru
        _
      %p208 = scmp.le.s32.totalorder 1, %s18
      %p209 = scmp.lt.s32.totalorder %s18, 3
      %p210 = pnand %p208, %p209
      %p211 = pneg %p210
      // Predicated region
      $region29: #{tpu_custom_call.1} parent=5 // pred_check
        _
      $region30: #{tpu_custom_call.1} parent=5 // pred_check_branch
        %213 = sbr.rel (%p210) target = $region32
      $region31: #{tpu_custom_call.1} parent=5 // pred_region
        %s214 = ssub.s32 %s18, 1
        %s215 = sand.u32 %s45, 1
        %s216 = scalar_lea.sflag [#allocation5], %s215
        %s217 = sand.u32 %s45, 1
        %s218 = smul.addr %s217, 64
        %s219 = scalar_lea.vmem [#allocation4], %s218
        // Predicated region
        $region33: #{tpu_custom_call.1} parent=31 // pred_check
          %p220 = pneg %p58
        $region34: #{tpu_custom_call.1} parent=31 // pred_check_branch
          %222 = sbr.rel (%p220) target = $region36
        $region35: #{tpu_custom_call.1} parent=31 // pred_region
          %223 = dma.done %s216, 1024
        $region36: #{tpu_custom_call.1} parent=31 // pred_fallthru
          _
        %s224 = sand.u32 %s23, 1
        %s225 = scalar_lea.sflag [#allocation8], %s224
        %s226 = sand.u32 %s73, 1
        %s227 = smul.addr %s226, 4
        %s228 = scalar_lea.vmem [#allocation7], %s227
        // Predicated region
        $region37: #{tpu_custom_call.1} parent=31 // pred_check
          %p229 = pneg %p86
        $region38: #{tpu_custom_call.1} parent=31 // pred_check_branch
          %231 = sbr.rel (%p229) target = $region40
        $region39: #{tpu_custom_call.1} parent=31 // pred_region
          %232 = dma.done %s225, 64
        $region40: #{tpu_custom_call.1} parent=31 // pred_fallthru
          _
        // Predicated region
        $region41: #{tpu_custom_call.1} parent=31 // pred_check
          %p233 = pneg %p107
        $region42: #{tpu_custom_call.1} parent=31 // pred_check_branch
          %235 = sbr.rel (%p233) target = $region44
        $region43: #{tpu_custom_call.1} parent=31 // pred_region
          %236 = dma.done [#allocation8], 1024
        $region44: #{tpu_custom_call.1} parent=31 // pred_fallthru
          _
        %s237 = sand.u32 %s45, 1
        %s238 = scalar_lea.sflag [#allocation5], %s237
        %s239 = sand.u32 %s45, 1
        %s240 = smul.addr %s239, 64
        %s241 = scalar_lea.vmem [#allocation4], %s240
        %p242 = pneg %p58
        %p243 = pneg %p55
        %s244 = sand.u32 %s23, 1
        %s245 = scalar_lea.sflag [#allocation8], %s244
        %s246 = sand.u32 %s73, 1
        %s247 = smul.addr %s246, 4
        %s248 = scalar_lea.vmem [#allocation7], %s247
        %p249 = pneg %p86
        %p250 = pneg %p83
        %p251 = pneg %p107
        %p252 = pneg %p104
        %p253 = pneg %p133
        %p254 = pneg %p130
        %s255 = sand.u32 %s120, 1
        %s256 = scalar_lea.sflag [#allocation6], %s255
        %s257 = sand.u32 %s120, 1
        %s258 = smul.addr %s257, 8
        %s259 = scalar_lea.vmem [#allocation10], %s258
        %s260 = smul.u32 8, %s27
        %s261 = smul.u32 2, %s28
        %p263 = scmp.eq.s32.totalorder %s28, 0
        // Predicated region
        $region45: #{tpu_custom_call.1} parent=31 // pred_check
          %p264 = pneg %p263
        $region46: #{tpu_custom_call.1} parent=31 // pred_check_branch
          %266 = sbr.rel (%p264) target = $region48
        $region47: #{tpu_custom_call.1} parent=31 // pred_region
          %267 = vst [vmem:[#allocation2] sm:$0xff] 0.0
          %vm268 = vcmask 7168
          %269 = vst.msk [vmem:[#allocation3] sm:$0xff] %vm268, 0.0
        $region48: #{tpu_custom_call.1} parent=31 // pred_fallthru
          _
        %v270 = vld [vmem:[%s219] sm:$0xf]
        %v271 = vld [vmem:[%s219 + $0x4] sm:$0xf]
        %v272 = vld [vmem:[%s219 + $0x8] sm:$0xf]
        %v273 = vld [vmem:[%s219 + $0xc] sm:$0xf]
        %v274 = vld [vmem:[%s219 + $0x10] sm:$0xf]
        %v275 = vld [vmem:[%s219 + $0x14] sm:$0xf]
        %v276 = vld [vmem:[%s219 + $0x18] sm:$0xf]
        %v277 = vld [vmem:[%s219 + $0x1c] sm:$0xf]
        %v278 = vld [vmem:[%s219 + $0x20] sm:$0xf]
        %v279 = vld [vmem:[%s219 + $0x24] sm:$0xf]
        %v280 = vld [vmem:[%s219 + $0x28] sm:$0xf]
        %v281 = vld [vmem:[%s219 + $0x2c] sm:$0xf]
        %v282 = vld [vmem:[%s219 + $0x30] sm:$0xf]
        %v283 = vld [vmem:[%s219 + $0x34] sm:$0xf]
        %v284 = vld [vmem:[%s219 + $0x38] sm:$0xf]
        %v285 = vld [vmem:[%s219 + $0x3c] sm:$0xf]
        %v286 = vld [vmem:[#allocation9] sm:$0xf]
        %v287 = vld [vmem:[#allocation9 + $0x4] sm:$0xf]
        %v288 = vld [vmem:[#allocation9 + $0x8] sm:$0xf]
        %v289 = vld [vmem:[#allocation9 + $0xc] sm:$0xf]
        %v290 = vld [vmem:[#allocation9 + $0x10] sm:$0xf]
        %v291 = vld [vmem:[#allocation9 + $0x14] sm:$0xf]
        %v292 = vld [vmem:[#allocation9 + $0x18] sm:$0xf]
        %v293 = vld [vmem:[#allocation9 + $0x1c] sm:$0xf]
        %v294 = vld [vmem:[#allocation9 + $0x20] sm:$0xf]
        %v295 = vld [vmem:[#allocation9 + $0x24] sm:$0xf]
        %v296 = vld [vmem:[#allocation9 + $0x28] sm:$0xf]
        %v297 = vld [vmem:[#allocation9 + $0x2c] sm:$0xf]
        %v298 = vld [vmem:[#allocation9 + $0x30] sm:$0xf]
        %v299 = vld [vmem:[#allocation9 + $0x34] sm:$0xf]
        %v300 = vld [vmem:[#allocation9 + $0x38] sm:$0xf]
        %v301 = vld [vmem:[#allocation9 + $0x3c] sm:$0xf]
        %v318 = vunpack.c.l.b16 %v270
        %v319 = vunpack.c.l.b16 %v271
        %v320 = vunpack.c.l.b16 %v272
        %v321 = vunpack.c.l.b16 %v273
        %v322 = vunpack.c.l.b16 %v274
        %v323 = vunpack.c.l.b16 %v275
        %v324 = vunpack.c.l.b16 %v276
        %v325 = vunpack.c.l.b16 %v277
        %v326 = vunpack.c.l.b16 %v278
        %v327 = vunpack.c.l.b16 %v279
        %v328 = vunpack.c.l.b16 %v280
        %v329 = vunpack.c.l.b16 %v281
        %v330 = vunpack.c.l.b16 %v282
        %v331 = vunpack.c.l.b16 %v283
        %v332 = vunpack.c.l.b16 %v284
        %v333 = vunpack.c.l.b16 %v285
        %v334 = vpack.c.b16 %v319, %v318
        %v335 = vpack.c.b16 %v321, %v320
        %v336 = vpack.c.b16 %v323, %v322
        %v337 = vpack.c.b16 %v325, %v324
        %v338 = vpack.c.b16 %v327, %v326
        %v339 = vpack.c.b16 %v329, %v328
        %v340 = vpack.c.b16 %v331, %v330
        %v341 = vpack.c.b16 %v333, %v332
        %v366 = vunpack.c.l.b16 %v286
        %v367 = vunpack.c.l.b16 %v287
        %v368 = vunpack.c.l.b16 %v288
        %v369 = vunpack.c.l.b16 %v289
        %v370 = vunpack.c.l.b16 %v290
        %v371 = vunpack.c.l.b16 %v291
        %v372 = vunpack.c.l.b16 %v292
        %v373 = vunpack.c.l.b16 %v293
        %v374 = vunpack.c.l.b16 %v294
        %v375 = vunpack.c.l.b16 %v295
        %v376 = vunpack.c.l.b16 %v296
        %v377 = vunpack.c.l.b16 %v297
        %v378 = vunpack.c.l.b16 %v298
        %v379 = vunpack.c.l.b16 %v299
        %v380 = vunpack.c.l.b16 %v300
        %v381 = vunpack.c.l.b16 %v301
        %v382 = vpack.c.b16 %v367, %v366
        %v383 = vpack.c.b16 %v369, %v368
        %v384 = vpack.c.b16 %v371, %v370
        %v385 = vpack.c.b16 %v373, %v372
        %v386 = vpack.c.b16 %v375, %v374
        %v387 = vpack.c.b16 %v377, %v376
        %v388 = vpack.c.b16 %v379, %v378
        %v389 = vpack.c.b16 %v381, %v380
        %398 = vmatprep.subr.bf16.mxu0 0
        %399 = vmatpush1.bf16.msra.mxu0 %v382
        %400 = vmatprep.subr.bf16.mxu0 0
        %401 = vmatpush1.bf16.msra.mxu0 %v383
        %402 = vmatprep.subr.bf16.mxu0 0
        %403 = vmatpush1.bf16.msra.mxu0 %v384
        %404 = vmatprep.subr.bf16.mxu0 0
        %405 = vmatpush1.bf16.msra.mxu0 %v385
        %406 = vmatprep.subr.bf16.mxu0 0
        %407 = vmatpush1.bf16.msra.mxu0 %v386
        %408 = vmatprep.subr.bf16.mxu0 0
        %409 = vmatpush1.bf16.msra.mxu0 %v387
        %410 = vmatprep.subr.bf16.mxu0 0
        %411 = vmatpush1.bf16.msra.mxu0 %v388
        %412 = vmatprep.subr.bf16.mxu0 0
        %413 = vmatpush1.bf16.msra.mxu0 %v389
        %414 = vmatprep.subr.bf16.mxu0 0
        %415 = vmatpush1.bf16.msra.mxu0 0
        %416 = vmatprep.subr.bf16.mxu0 0
        %417 = vmatpush1.bf16.msra.mxu0 0
        %418 = vmatprep.subr.bf16.mxu0 0
        %419 = vmatpush1.bf16.msra.mxu0 0
        %420 = vmatprep.subr.bf16.mxu0 0
        %421 = vmatpush1.bf16.msra.mxu0 0
        %422 = vmatprep.subr.bf16.mxu0 0
        %423 = vmatpush1.bf16.msra.mxu0 0
        %424 = vmatprep.subr.bf16.mxu0 0
        %425 = vmatpush1.bf16.msra.mxu0 0
        %426 = vmatprep.subr.bf16.mxu0 0
        %427 = vmatpush1.bf16.msra.mxu0 0
        %428 = vmatprep.subr.bf16.mxu0 0
        %429 = vmatpush1.bf16.msra.mxu0 0
        %430 = vmatprep.mubr.bf16.mxu0 0
        %431 = vmatmul.mubr.bf16.gmra.mrb[0].mxu0 %v334
        %v432 = vpop.f32.mrb[0].mxu0
        %v433 = vadd.f32 0.0, %v432
        %v434 = vpop.f32.mrb[0].mxu0
        %v435 = vpop.f32.mrb[0].mxu0
        %v436 = vadd.f32 0.0, %v435
        %v437 = vpop.f32.mrb[0].mxu0
        %438 = vmatprep.mubr.bf16.mxu0 0
        %439 = vmatmul.mubr.bf16.gmra.mrb[0].mxu0 %v335
        %v440 = vpop.f32.mrb[0].mxu0
        %v441 = vadd.f32 0.0, %v440
        %v442 = vpop.f32.mrb[0].mxu0
        %v443 = vpop.f32.mrb[0].mxu0
        %v444 = vadd.f32 0.0, %v443
        %v445 = vpop.f32.mrb[0].mxu0
        %446 = vmatprep.mubr.bf16.mxu0 0
        %447 = vmatmul.mubr.bf16.gmra.mrb[0].mxu0 %v336
        %v448 = vpop.f32.mrb[0].mxu0
        %v449 = vadd.f32 0.0, %v448
        %v450 = vpop.f32.mrb[0].mxu0
        %v451 = vpop.f32.mrb[0].mxu0
        %v452 = vadd.f32 0.0, %v451
        %v453 = vpop.f32.mrb[0].mxu0
        %454 = vmatprep.mubr.bf16.mxu0 0
        %455 = vmatmul.mubr.bf16.gmra.mrb[0].mxu0 %v337
        %v456 = vpop.f32.mrb[0].mxu0
        %v457 = vadd.f32 0.0, %v456
        %v458 = vpop.f32.mrb[0].mxu0
        %v459 = vpop.f32.mrb[0].mxu0
        %v460 = vadd.f32 0.0, %v459
        %v461 = vpop.f32.mrb[0].mxu0
        %462 = vmatprep.mubr.bf16.mxu0 0
        %463 = vmatmul.mubr.bf16.gmra.mrb[0].mxu0 %v338
        %v464 = vpop.f32.mrb[0].mxu0
        %v465 = vadd.f32 0.0, %v464
        %v466 = vpop.f32.mrb[0].mxu0
        %v467 = vpop.f32.mrb[0].mxu0
        %v468 = vadd.f32 0.0, %v467
        %v469 = vpop.f32.mrb[0].mxu0
        %470 = vmatprep.mubr.bf16.mxu0 0
        %471 = vmatmul.mubr.bf16.gmra.mrb[0].mxu0 %v339
        %v472 = vpop.f32.mrb[0].mxu0
        %v473 = vadd.f32 0.0, %v472
        %v474 = vpop.f32.mrb[0].mxu0
        %v475 = vpop.f32.mrb[0].mxu0
        %v476 = vadd.f32 0.0, %v475
        %v477 = vpop.f32.mrb[0].mxu0
        %478 = vmatprep.mubr.bf16.mxu0 0
        %479 = vmatmul.mubr.bf16.gmra.mrb[0].mxu0 %v340
        %v480 = vpop.f32.mrb[0].mxu0
        %v481 = vadd.f32 0.0, %v480
        %v482 = vpop.f32.mrb[0].mxu0
        %v483 = vpop.f32.mrb[0].mxu0
        %v484 = vadd.f32 0.0, %v483
        %v485 = vpop.f32.mrb[0].mxu0
        %486 = vmatprep.mubr.bf16.mxu0 0
        %487 = vmatmul.mubr.bf16.gmra.mrb[0].mxu0 %v341
        %v488 = vpop.f32.mrb[0].mxu0
        %v489 = vadd.f32 0.0, %v488
        %v490 = vpop.f32.mrb[0].mxu0
        %v491 = vpop.f32.mrb[0].mxu0
        %v492 = vadd.f32 0.0, %v491
        %v493 = vpop.f32.mrb[0].mxu0
        %494 = vdwg.mxu0
        %v495 = vld [vmem:[%s228] sm:$0xf]
        %v496 = vunpack.c.l.bf16 %v495
        %v497 = vld [vmem:[#allocation2] sm:$0xff]
        %v498 = vlaneseq
        %v499 = vshrl.u32 %v498, 7
        %v500 = vsub.s32 0, %v499
        %v501 = vrot.slane %v496, %v500
        %503 = vbcast.lane.b32.xlu0 %v501, 256
        %v504 = vpop.permute.xlu0 %503
        %s506 = sor.u32 256, 8
        %507 = vbcast.lane.b32.xlu0 %v501, %s506
        %v508 = vpop.permute.xlu0 %507
        %v509 = vlaneseq
        %v510 = vshrl.u32 %v509, 7
        %v511 = vsub.s32 1, %v510
        %v512 = vrot.slane %v496, %v511
        %514 = vbcast.lane.b32.xlu0 %v512, 256
        %v515 = vpop.permute.xlu0 %514
        %s517 = sor.u32 256, 8
        %518 = vbcast.lane.b32.xlu0 %v512, %s517
        %v519 = vpop.permute.xlu0 %518
        %v520 = vlaneseq
        %v521 = vshrl.u32 %v520, 7
        %v522 = vsub.s32 2, %v521
        %v523 = vrot.slane %v496, %v522
        %525 = vbcast.lane.b32.xlu0 %v523, 256
        %v526 = vpop.permute.xlu0 %525
        %s528 = sor.u32 256, 8
        %529 = vbcast.lane.b32.xlu0 %v523, %s528
        %v530 = vpop.permute.xlu0 %529
        %v531 = vlaneseq
        %v532 = vshrl.u32 %v531, 7
        %v533 = vsub.s32 3, %v532
        %v534 = vrot.slane %v496, %v533
        %536 = vbcast.lane.b32.xlu0 %v534, 256
        %v537 = vpop.permute.xlu0 %536
        %s539 = sor.u32 256, 8
        %540 = vbcast.lane.b32.xlu0 %v534, %s539
        %v541 = vpop.permute.xlu0 %540
        %v542 = vlaneseq
        %v543 = vshrl.u32 %v542, 7
        %v544 = vsub.s32 4, %v543
        %v545 = vrot.slane %v496, %v544
        %547 = vbcast.lane.b32.xlu0 %v545, 256
        %v548 = vpop.permute.xlu0 %547
        %s550 = sor.u32 256, 8
        %551 = vbcast.lane.b32.xlu0 %v545, %s550
        %v552 = vpop.permute.xlu0 %551
        %v553 = vlaneseq
        %v554 = vshrl.u32 %v553, 7
        %v555 = vsub.s32 5, %v554
        %v556 = vrot.slane %v496, %v555
        %558 = vbcast.lane.b32.xlu0 %v556, 256
        %v559 = vpop.permute.xlu0 %558
        %s561 = sor.u32 256, 8
        %562 = vbcast.lane.b32.xlu0 %v556, %s561
        %v563 = vpop.permute.xlu0 %562
        %v564 = vlaneseq
        %v565 = vshrl.u32 %v564, 7
        %v566 = vsub.s32 6, %v565
        %v567 = vrot.slane %v496, %v566
        %569 = vbcast.lane.b32.xlu0 %v567, 256
        %v570 = vpop.permute.xlu0 %569
        %s572 = sor.u32 256, 8
        %573 = vbcast.lane.b32.xlu0 %v567, %s572
        %v574 = vpop.permute.xlu0 %573
        %v575 = vlaneseq
        %v576 = vshrl.u32 %v575, 7
        %v577 = vsub.s32 7, %v576
        %v578 = vrot.slane %v496, %v577
        %580 = vbcast.lane.b32.xlu0 %v578, 256
        %v581 = vpop.permute.xlu0 %580
        %s583 = sor.u32 256, 8
        %584 = vbcast.lane.b32.xlu0 %v578, %s583
        %v585 = vpop.permute.xlu0 %584
        %v586 = vmul.f32 %v433, %v504
        %v587 = vmul.f32 %v436, %v508
        %v588 = vmul.f32 %v441, %v515
        %v589 = vmul.f32 %v444, %v519
        %v590 = vmul.f32 %v449, %v526
        %v591 = vmul.f32 %v452, %v530
        %v592 = vmul.f32 %v457, %v537
        %v593 = vmul.f32 %v460, %v541
        %v594 = vmul.f32 %v465, %v548
        %v595 = vmul.f32 %v468, %v552
        %v596 = vmul.f32 %v473, %v559
        %v597 = vmul.f32 %v476, %v563
        %v598 = vmul.f32 %v481, %v570
        %v599 = vmul.f32 %v484, %v574
        %v600 = vmul.f32 %v489, %v581
        %v601 = vmul.f32 %v492, %v585
        %v602 = vadd.f32 %v586, %v587
        %v603 = vrot.slane %v602, 4
        %v604 = vadd.f32 %v602, %v603
        %v605 = vrot.slane %v604, 2
        %v606 = vadd.f32 %v604, %v605
        %v607 = vrot.slane %v606, 1
        %v608 = vadd.f32 %v606, %v607
        %v609 = vadd.f32 %v588, %v589
        %v610 = vrot.slane %v609, 4
        %v611 = vadd.f32 %v609, %v610
        %v612 = vrot.slane %v611, 2
        %v613 = vadd.f32 %v611, %v612
        %v614 = vrot.slane %v613, 1
        %v615 = vadd.f32 %v613, %v614
        %v616 = vadd.f32 %v590, %v591
        %v617 = vrot.slane %v616, 4
        %v618 = vadd.f32 %v616, %v617
        %v619 = vrot.slane %v618, 2
        %v620 = vadd.f32 %v618, %v619
        %v621 = vrot.slane %v620, 1
        %v622 = vadd.f32 %v620, %v621
        %v623 = vadd.f32 %v592, %v593
        %v624 = vrot.slane %v623, 4
        %v625 = vadd.f32 %v623, %v624
        %v626 = vrot.slane %v625, 2
        %v627 = vadd.f32 %v625, %v626
        %v628 = vrot.slane %v627, 1
        %v629 = vadd.f32 %v627, %v628
        %v630 = vadd.f32 %v594, %v595
        %v631 = vrot.slane %v630, 4
        %v632 = vadd.f32 %v630, %v631
        %v633 = vrot.slane %v632, 2
        %v634 = vadd.f32 %v632, %v633
        %v635 = vrot.slane %v634, 1
        %v636 = vadd.f32 %v634, %v635
        %v637 = vadd.f32 %v596, %v597
        %v638 = vrot.slane %v637, 4
        %v639 = vadd.f32 %v637, %v638
        %v640 = vrot.slane %v639, 2
        %v641 = vadd.f32 %v639, %v640
        %v642 = vrot.slane %v641, 1
        %v643 = vadd.f32 %v641, %v642
        %v644 = vadd.f32 %v598, %v599
        %v645 = vrot.slane %v644, 4
        %v646 = vadd.f32 %v644, %v645
        %v647 = vrot.slane %v646, 2
        %v648 = vadd.f32 %v646, %v647
        %v649 = vrot.slane %v648, 1
        %v650 = vadd.f32 %v648, %v649
        %v651 = vadd.f32 %v600, %v601
        %v652 = vrot.slane %v651, 4
        %v653 = vadd.f32 %v651, %v652
        %v654 = vrot.slane %v653, 2
        %v655 = vadd.f32 %v653, %v654
        %v656 = vrot.slane %v655, 1
        %v657 = vadd.f32 %v655, %v656
        %vm666 = vcmask 1041409
        %v667 = vsel %vm666, %v615, %v608
        %vm668 = vcmask 1042434
        %v669 = vsel %vm668, %v622, %v667
        %vm670 = vcmask 1043459
        %v671 = vsel %vm670, %v629, %v669
        %vm672 = vcmask 1044484
        %v673 = vsel %vm672, %v636, %v671
        %vm674 = vcmask 1045509
        %v675 = vsel %vm674, %v643, %v673
        %vm676 = vcmask 1046534
        %v677 = vsel %vm676, %v650, %v675
        %vm678 = vcmask 1047559
        %v679 = vsel %vm678, %v657, %v677
        %v681 = vadd.f32 %v497, %v679
        %682 = vst [vmem:[#allocation2] sm:$0xff] %v681
        %v683 = vld [vmem:[#allocation3] sm:$0xff]
        %vm684 = vcmask 130048
        %v685 = vsel %vm684, %v496, 0.0
        %686 = vadd.xlane.f32.xlu0 %v685
        %v687 = vpop.xlane.xlu0 %686
        %v688 = vadd.f32 %v683, %v687
        %vm689 = vcmask 7168
        %690 = vst.msk [vmem:[#allocation3] sm:$0xff] %vm689, %v688
        // Predicated region
        $region49: #{tpu_custom_call.1} parent=31 // pred_check
          %p691 = pneg %p263
        $region50: #{tpu_custom_call.1} parent=31 // pred_check_branch
          %693 = sbr.rel (%p691) target = $region52
        $region51: #{tpu_custom_call.1} parent=31 // pred_region
          %v694 = vld [vmem:[#allocation3] sm:$0xff]
          %v695 = vmax.f32 %v694, 1.0
          %v696 = vld [vmem:[#allocation2] sm:$0xff]
          %v697 = vrcp.pop %v695
          %699 = vset.pattern.permute.xlu0 0
          %700 = vperm.xlu0 %699, %v697
          %v701 = vpop.permute.xlu0 %700
          %v703 = vmul.f32 %v696, %v701
          %704 = vst [vmem:[%s259] sm:$0xff] %v703
        $region52: #{tpu_custom_call.1} parent=31 // pred_fallthru
          _
        %s705 = sand.u32 %s120, 1
        %s706 = scalar_lea.sflag [#allocation6], %s705
        %s707 = sand.u32 %s120, 1
        %s708 = smul.addr %s707, 8
        %s709 = scalar_lea.vmem [#allocation10], %s708
        // Predicated region
        $region53: #{tpu_custom_call.1} parent=31 // pred_check
          %p710 = pneg %p130
        $region54: #{tpu_custom_call.1} parent=31 // pred_check_branch
          %712 = sbr.rel (%p710) target = $region56
        $region55: #{tpu_custom_call.1} parent=31 // pred_region
          %s714 = ssub.s32 128, 128
          %715 = vsyncadd %s706, %s714
          %s716 = smul.addr %s27, 128
          %s717 = scalar_lea.hbm %s3, %s716
          %s719 = sshll.u32 %s709, 4
          %s720 = int_to_ptr.vmem [resolvable:$true] %s719
          %722 = dma.vmem_to_hbm [thread:$0]  %s720, 128, %s717, %s706
        $region56: #{tpu_custom_call.1} parent=31 // pred_fallthru
          _
      $region32: #{tpu_custom_call.1} parent=5 // pred_fallthru
        _
      %p723 = scmp.le.s32.totalorder 2, %s18
      // Predicated region
      $region57: #{tpu_custom_call.1} parent=5 // pred_check
        %p724 = pneg %p723
      $region58: #{tpu_custom_call.1} parent=5 // pred_check_branch
        %726 = sbr.rel (%p724) target = $region60
      $region59: #{tpu_custom_call.1} parent=5 // pred_region
        %s727 = ssub.s32 %s18, 2
        // Predicated region
        $region61: #{tpu_custom_call.1} parent=59 // pred_check
          %p728 = pneg %p136
        $region62: #{tpu_custom_call.1} parent=59 // pred_check_branch
          %730 = sbr.rel (%p728) target = $region64
        $region63: #{tpu_custom_call.1} parent=59 // pred_region
          %s731 = sand.u32 %s121, 1
          %s732 = scalar_lea.sflag [#allocation6], %s731
          %s733 = sand.u32 %s121, 1
          %s734 = smul.addr %s733, 8
          %s735 = scalar_lea.vmem [#allocation10], %s734
          %736 = dma.done %s732, 128
        $region64: #{tpu_custom_call.1} parent=59 // pred_fallthru
          _
      $region60: #{tpu_custom_call.1} parent=5 // pred_fallthru
        _
    $region6: #{tpu_custom_call.1} parent=1 // loop_footer
      %s22 = sadd.s32 1, %s18
    $region7: #{tpu_custom_call.1} parent=1 // loop_footer_branch
      %17 = sbr.rel target = $region3
    $region8: #{tpu_custom_call.1} parent=1 // loop_exit
      _
    %737 = vsyncpa [#allocation5], 1
    %s738 = scalar_lea.sflag [#allocation5], 1
    %739 = vsyncpa %s738, 1
    %740 = vsyncpa [#allocation8], 1
    %s741 = scalar_lea.sflag [#allocation8], 1
    %742 = vsyncpa %s741, 1
    %743 = vsyncpa [#allocation6], 1
    %s744 = scalar_lea.sflag [#allocation6], 1
    %745 = vsyncpa %s744, 1

// kernel: tpu_custom_call.1
$region0: #{tpu_custom_call.1}
  #allocation0 [shape = 'u32[]', space=smem, size = 0x4, offset = 0x4, fixed_abs, tag = 'smem constant byte address 0x4 - core index']
  #allocation1 [shape = 'u32[144,128]{1,0:T(1,128)}', space=vmem, size = 0x12000, scoped, tag = 'internal scratch']
  #allocation2 [shape = 'f32[8,128]{1,0:T(8,128)}', space=vmem, size = 0x1000, scoped, tag = 'scratch operand']
  #allocation3 [shape = 'f32[8,1]{1,0:T(8,128)}', space=vmem, size = 0x1000, scoped, tag = 'scratch operand']
  %s0 = inlined_call_operand.hbm [shape: bf16[16,16,128], index: 0, kind: input, shape index: {}]
  %s1 = inlined_call_operand.hbm [shape: bf16[16,16], index: 1, kind: input, shape index: {}]
  %s2 = inlined_call_operand.hbm [shape: bf16[128,128], index: 2, kind: input, shape index: {}]
  %s3 = inlined_call_operand.hbm [shape: f32[16,128], index: 3, kind: output, shape index: {}]
  %s4 = sld [smem:[#allocation0]]
  $region65: #{tpu_custom_call.1} parent=0
    _
  %s6 = ssub.s32 1, %s4
  %s7 = scalar_select 0, %s6, %s4
  $region1: #{tpu_custom_call.1} parent=0
    #allocation4 [shape = 'u8[65536]{0}', space=vmem, size = 0x10000, scoped, tag = 'input window, operand 0']
    #allocation5 [shape = 's32[2]{0}', space=sflag, size = 0x8, scoped, tag = 'scoped memory for tpu_custom_call.1']
    #allocation6 [shape = 's32[2]{0}', space=sflag, size = 0x8, scoped, tag = 'scoped memory for tpu_custom_call.1']
    #allocation7 [shape = 'u8[4096]{0}', space=vmem, size = 0x1000, scoped, tag = 'input window, operand 1']
    #allocation8 [shape = 's32[2]{0}', space=sflag, size = 0x8, scoped, tag = 'scoped memory for tpu_custom_call.1']
    #allocation9 [shape = 'u8[32768]{0}', space=vmem, size = 0x8000, scoped, tag = 'input window, operand 2, single buffered']
    #allocation10 [shape = 'u8[8192]{0}', space=vmem, size = 0x2000, scoped, tag = 'output window, operand 0']
    %8 = vsyncpa [#allocation5], 0
    %s9 = scalar_lea.sflag [#allocation5], 1
    %10 = vsyncpa %s9, 0
    %11 = vsyncpa [#allocation8], 0
    %s12 = scalar_lea.sflag [#allocation8], 1
    %13 = vsyncpa %s12, 0
    %14 = vsyncpa [#allocation6], 0
    %s15 = scalar_lea.sflag [#allocation6], 1
    %16 = vsyncpa %s15, 0
    loop: start=0, step=1, limit=4
    $region2: #{tpu_custom_call.1} parent=1 // loop_pre_header
      _
    $region3: #{tpu_custom_call.1} parent=1 // loop_header
      %s18 = sphi 0, %s22
      %p19 = scmp.ge.s32.totalorder %s18, 4
      %s25 = sphi 0, %s37
      %s26 = sphi 0, %s33
      %s27 = sphi 0, %s25
      %s28 = sphi 0, %s26
      %s29 = sphi 0, %s27
      %s30 = sphi 0, %s28
      %s42 = sphi 0, %s44
      %s45 = sphi 0, %s42
      %s46 = sphi 0, %s45
      %s62 = sphi 0, %s46
      %s70 = sphi 0, %s72
      %s73 = sphi 0, %s70
      %s74 = sphi 0, %s73
      %s90 = sphi 0, %s74
      %s94 = sphi 0, %s94
      %s96 = sphi 0, %s94
      %s97 = sphi 0, %s96
      %s111 = sphi 0, %s97
      %s117 = sphi 0, %s119
      %s120 = sphi 0, %s117
      %s121 = sphi 0, %s120
      %s137 = sphi 0, %s121
    $region4: #{tpu_custom_call.1} parent=1 // loop_header_branch
      %21 = sbr.rel (%p19) target = $region8
    $region5: #{tpu_custom_call.1} parent=1 // loop_body
      %s23 = ssub.s32 %s18, 1
      %s24 = ssub.s32 %s18, 2
      %s31 = sadd.s32 1, %s26
      %p32 = scmp.ge.s32.totalorder %s31, 1
      %s33 = scalar_select %p32, 0, %s31
      %s34 = sadd.s32 1, %s25
      %s35 = scalar_select %p32, %s34, %s25
      %p36 = scmp.ge.s32.totalorder %s35, 2
      %s37 = scalar_select %p36, 0, %s35
      %s38 = ssub.s32 %s25, %s37
      %s39 = ssub.s32 %s26, %s33
      %s40 = sor.u32 %s38, %s39
      %p41 = scmp.eq.s32.totalorder %s40, 0
      %s43 = sadd.s32 %s42, 1
      %s44 = scalar_select %p41, %s42, %s43
      %p47 = pneg %p41
      %p48 = scmp.eq.s32.totalorder %s18, 1
      %p49 = por %p47, %p48
      %p50 = scmp.ne.s32.totalorder %s42, %s45
      %p51 = scmp.eq.s32.totalorder %s18, 0
      %p52 = por %p50, %p51
      %p53 = scmp.ne.s32.totalorder %s42, %s45
      %p54 = scmp.eq.s32.totalorder %s23, 1
      %p55 = por %p53, %p54
      %p56 = scmp.ne.s32.totalorder %s45, %s46
      %p57 = scmp.eq.s32.totalorder %s23, 0
      %p58 = por %p56, %p57
      %p59 = scmp.ne.s32.totalorder %s45, %s46
      %p60 = scmp.eq.s32.totalorder %s24, 1
      %p61 = por %p59, %p60
      %p63 = scmp.ne.s32.totalorder %s46, %s62
      %p64 = scmp.eq.s32.totalorder %s24, 0
      %p65 = por %p63, %p64
      %s66 = ssub.s32 %s25, %s37
      %s67 = ssub.s32 %s26, %s33
      %s68 = sor.u32 %s66, %s67
      %p69 = scmp.eq.s32.totalorder %s68, 0
      %s71 = sadd.s32 %s70, 1
      %s72 = scalar_select %p69, %s70, %s71
      %p75 = pneg %p69
      %p76 = scmp.eq.s32.totalorder %s18, 1
      %p77 = por %p75, %p76
      %p78 = scmp.ne.s32.totalorder %s70, %s73
      %p79 = scmp.eq.s32.totalorder %s18, 0
      %p80 = por %p78, %p79
      %p81 = scmp.ne.s32.totalorder %s70, %s73
      %p82 = scmp.eq.s32.totalorder %s23, 1
      %p83 = por %p81, %p82
      %p84 = scmp.ne.s32.totalorder %s73, %s74
      %p85 = scmp.eq.s32.totalorder %s23, 0
      %p86 = por %p84, %p85
      %p87 = scmp.ne.s32.totalorder %s73, %s74
      %p88 = scmp.eq.s32.totalorder %s24, 1
      %p89 = por %p87, %p88
      %p91 = scmp.ne.s32.totalorder %s74, %s90
      %p92 = scmp.eq.s32.totalorder %s24, 0
      %p93 = por %p91, %p92
      %s95 = sadd.s32 %s94, 1
      %p98 = scmp.eq.s32.totalorder %s18, 1
      %p99 = scmp.ne.s32.totalorder %s94, %s96
      %p100 = scmp.eq.s32.totalorder %s18, 0
      %p101 = por %p99, %p100
      %p102 = scmp.ne.s32.totalorder %s94, %s96
      %p103 = scmp.eq.s32.totalorder %s23, 1
      %p104 = por %p102, %p103
      %p105 = scmp.ne.s32.totalorder %s96, %s97
      %p106 = scmp.eq.s32.totalorder %s23, 0
      %p107 = por %p105, %p106
      %p108 = scmp.ne.s32.totalorder %s96, %s97
      %p109 = scmp.eq.s32.totalorder %s24, 1
      %p110 = por %p108, %p109
      %p112 = scmp.ne.s32.totalorder %s97, %s111
      %p113 = scmp.eq.s32.totalorder %s24, 0
      %p114 = por %p112, %p113
      %s115 = ssub.s32 %s25, %s37
      %p116 = scmp.eq.s32.totalorder %s115, 0
      %s118 = sadd.s32 %s117, 1
      %s119 = scalar_select %p116, %s117, %s118
      %p122 = pneg %p116
      %p123 = scmp.eq.s32.totalorder %s18, 1
      %p124 = por %p122, %p123
      %p125 = scmp.ne.s32.totalorder %s117, %s120
      %p126 = scmp.eq.s32.totalorder %s18, 0
      %p127 = por %p125, %p126
      %p128 = scmp.ne.s32.totalorder %s117, %s120
      %p129 = scmp.eq.s32.totalorder %s23, 1
      %p130 = por %p128, %p129
      %p131 = scmp.ne.s32.totalorder %s120, %s121
      %p132 = scmp.eq.s32.totalorder %s23, 0
      %p133 = por %p131, %p132
      %p134 = scmp.ne.s32.totalorder %s120, %s121
      %p135 = scmp.eq.s32.totalorder %s24, 1
      %p136 = por %p134, %p135
      %p138 = scmp.ne.s32.totalorder %s121, %s137
      %p139 = scmp.eq.s32.totalorder %s24, 0
      %p140 = por %p138, %p139
      %p141 = scmp.le.s32.totalorder 1, %s18
      %p142 = scmp.lt.s32.totalorder %s18, 3
      %p143 = pnand %p141, %p142
      %p144 = pneg %p143
      // Predicated region
      $region9: #{tpu_custom_call.1} parent=5 // pred_check
        _
      $region10: #{tpu_custom_call.1} parent=5 // pred_check_branch
        %146 = sbr.rel (%p143) target = $region12
      $region11: #{tpu_custom_call.1} parent=5 // pred_region
        %s147 = ssub.s32 %s18, 1
        // Predicated region
        $region13: #{tpu_custom_call.1} parent=11 // pred_check
          %p148 = pneg %p107
        $region14: #{tpu_custom_call.1} parent=11 // pred_check_branch
          %150 = sbr.rel (%p148) target = $region16
        $region15: #{tpu_custom_call.1} parent=11 // pred_region
          %s152 = ssub.s32 1024, 1024
          %153 = vsyncadd [#allocation8], %s152
          %s154 = sshll.u32 [#allocation9], 4
          %s155 = int_to_ptr.vmem [resolvable:$true] %s154
          %160 = dma.hbm_to_vmem [thread:$0]  %s2, 1024, %s155, [#allocation8], 64, 64, 4
        $region16: #{tpu_custom_call.1} parent=11 // pred_fallthru
          _
      $region12: #{tpu_custom_call.1} parent=5 // pred_fallthru
        _
      %p161 = scmp.lt.s32.totalorder %s18, 2
      // Predicated region
      $region17: #{tpu_custom_call.1} parent=5 // pred_check
        %p162 = pneg %p161
      $region18: #{tpu_custom_call.1} parent=5 // pred_check_branch
        %164 = sbr.rel (%p162) target = $region20
      $region19: #{tpu_custom_call.1} parent=5 // pred_region
        // Predicated region
        $region21: #{tpu_custom_call.1} parent=19 // pred_check
          %p165 = pneg %p52
        $region22: #{tpu_custom_call.1} parent=19 // pred_check_branch
          %167 = sbr.rel (%p165) target = $region24
        $region23: #{tpu_custom_call.1} parent=19 // pred_region
          %s168 = sand.u32 %s42, 1
          %s169 = scalar_lea.sflag [#allocation5], %s168
          %s170 = sand.u32 %s42, 1
          %s171 = smul.addr %s170, 64
          %s172 = scalar_lea.vmem [#allocation4], %s171
          %s173 = smul.u32 8, %s25
          %s174 = smul.u32 2, %s26
          %s176 = ssub.s32 1024, 1024
          %177 = vsyncadd %s169, %s176
          %s178 = smul.addr %s173, 2
          %s179 = sadd.s32 %s174, %s178
          %s180 = smul.addr %s179, 64
          %s181 = scalar_lea.hbm %s0, %s180
          %s182 = sshll.u32 %s172, 4
          %s183 = int_to_ptr.vmem [resolvable:$true] %s182
          %188 = dma.hbm_to_vmem [thread:$0]  %s181, 1024, %s183, %s169, 64, 64, 4
        $region24: #{tpu_custom_call.1} parent=19 // pred_fallthru
          _
        // Predicated region
        $region25: #{tpu_custom_call.1} parent=19 // pred_check
          %p189 = pneg %p80
        $region26: #{tpu_custom_call.1} parent=19 // pred_check_branch
          %191 = sbr.rel (%p189) target = $region28
        $region27: #{tpu_custom_call.1} parent=19 // pred_region
          %s192 = sand.u32 %s18, 1
          %s193 = scalar_lea.sflag [#allocation8], %s192
          %s194 = sand.u32 %s70, 1
          %s195 = smul.addr %s194, 4
          %s196 = scalar_lea.vmem [#allocation7], %s195
          %s198 = ssub.s32 64, 64
          %199 = vsyncadd %s193, %s198
          %s200 = sadd.s32 %s26, %s25
          %s201 = smul.addr %s200, 64
          %s202 = scalar_lea.hbm %s1, %s201
          %s204 = sshll.u32 %s196, 4
          %s205 = int_to_ptr.vmem [resolvable:$true] %s204
          %207 = dma.hbm_to_vmem [thread:$0]  %s202, 64, %s205, %s193
        $region28: #{tpu_custom_call.1} parent=19 // pred_fallthru
          _
      $region20: #{tpu_custom_call.1} parent=5 // pred_fallthru
        _
      %p208 = scmp.le.s32.totalorder 1, %s18
      %p209 = scmp.lt.s32.totalorder %s18, 3
      %p210 = pnand %p208, %p209
      %p211 = pneg %p210
      // Predicated region
      $region29: #{tpu_custom_call.1} parent=5 // pred_check
        _
      $region30: #{tpu_custom_call.1} parent=5 // pred_check_branch
        %213 = sbr.rel (%p210) target = $region32
      $region31: #{tpu_custom_call.1} parent=5 // pred_region
        %s214 = ssub.s32 %s18, 1
        %s215 = sand.u32 %s45, 1
        %s216 = scalar_lea.sflag [#allocation5], %s215
        %s217 = sand.u32 %s45, 1
        %s218 = smul.addr %s217, 64
        %s219 = scalar_lea.vmem [#allocation4], %s218
        // Predicated region
        $region33: #{tpu_custom_call.1} parent=31 // pred_check
          %p220 = pneg %p58
        $region34: #{tpu_custom_call.1} parent=31 // pred_check_branch
          %222 = sbr.rel (%p220) target = $region36
        $region35: #{tpu_custom_call.1} parent=31 // pred_region
          %223 = dma.done %s216, 1024
        $region36: #{tpu_custom_call.1} parent=31 // pred_fallthru
          _
        %s224 = sand.u32 %s23, 1
        %s225 = scalar_lea.sflag [#allocation8], %s224
        %s226 = sand.u32 %s73, 1
        %s227 = smul.addr %s226, 4
        %s228 = scalar_lea.vmem [#allocation7], %s227
        // Predicated region
        $region37: #{tpu_custom_call.1} parent=31 // pred_check
          %p229 = pneg %p86
        $region38: #{tpu_custom_call.1} parent=31 // pred_check_branch
          %231 = sbr.rel (%p229) target = $region40
        $region39: #{tpu_custom_call.1} parent=31 // pred_region
          %232 = dma.done %s225, 64
        $region40: #{tpu_custom_call.1} parent=31 // pred_fallthru
          _
        // Predicated region
        $region41: #{tpu_custom_call.1} parent=31 // pred_check
          %p233 = pneg %p107
        $region42: #{tpu_custom_call.1} parent=31 // pred_check_branch
          %235 = sbr.rel (%p233) target = $region44
        $region43: #{tpu_custom_call.1} parent=31 // pred_region
          %236 = dma.done [#allocation8], 1024
        $region44: #{tpu_custom_call.1} parent=31 // pred_fallthru
          _
        %s237 = sand.u32 %s45, 1
        %s238 = scalar_lea.sflag [#allocation5], %s237
        %s239 = sand.u32 %s45, 1
        %s240 = smul.addr %s239, 64
        %s241 = scalar_lea.vmem [#allocation4], %s240
        %p242 = pneg %p58
        %p243 = pneg %p55
        %s244 = sand.u32 %s23, 1
        %s245 = scalar_lea.sflag [#allocation8], %s244
        %s246 = sand.u32 %s73, 1
        %s247 = smul.addr %s246, 4
        %s248 = scalar_lea.vmem [#allocation7], %s247
        %p249 = pneg %p86
        %p250 = pneg %p83
        %p251 = pneg %p107
        %p252 = pneg %p104
        %p253 = pneg %p133
        %p254 = pneg %p130
        %s255 = sand.u32 %s120, 1
        %s256 = scalar_lea.sflag [#allocation6], %s255
        %s257 = sand.u32 %s120, 1
        %s258 = smul.addr %s257, 8
        %s259 = scalar_lea.vmem [#allocation10], %s258
        %s260 = smul.u32 8, %s27
        %s261 = smul.u32 2, %s28
        %p263 = scmp.eq.s32.totalorder %s28, 0
        // Predicated region
        $region45: #{tpu_custom_call.1} parent=31 // pred_check
          %p264 = pneg %p263
        $region46: #{tpu_custom_call.1} parent=31 // pred_check_branch
          %266 = sbr.rel (%p264) target = $region48
        $region47: #{tpu_custom_call.1} parent=31 // pred_region
          %267 = vst [vmem:[#allocation2] sm:$0xff] 0.0
          %vm268 = vcmask 7168
          %269 = vst.msk [vmem:[#allocation3] sm:$0xff] %vm268, 0.0
        $region48: #{tpu_custom_call.1} parent=31 // pred_fallthru
          _
        %v270 = vld [vmem:[%s219] sm:$0xf]
        %v271 = vld [vmem:[%s219 + $0x4] sm:$0xf]
        %v272 = vld [vmem:[%s219 + $0x8] sm:$0xf]
        %v273 = vld [vmem:[%s219 + $0xc] sm:$0xf]
        %v274 = vld [vmem:[%s219 + $0x10] sm:$0xf]
        %v275 = vld [vmem:[%s219 + $0x14] sm:$0xf]
        %v276 = vld [vmem:[%s219 + $0x18] sm:$0xf]
        %v277 = vld [vmem:[%s219 + $0x1c] sm:$0xf]
        %v278 = vld [vmem:[%s219 + $0x20] sm:$0xf]
        %v279 = vld [vmem:[%s219 + $0x24] sm:$0xf]
        %v280 = vld [vmem:[%s219 + $0x28] sm:$0xf]
        %v281 = vld [vmem:[%s219 + $0x2c] sm:$0xf]
        %v282 = vld [vmem:[%s219 + $0x30] sm:$0xf]
        %v283 = vld [vmem:[%s219 + $0x34] sm:$0xf]
        %v284 = vld [vmem:[%s219 + $0x38] sm:$0xf]
        %v285 = vld [vmem:[%s219 + $0x3c] sm:$0xf]
        %v286 = vld [vmem:[#allocation9] sm:$0xf]
        %v287 = vld [vmem:[#allocation9 + $0x4] sm:$0xf]
        %v288 = vld [vmem:[#allocation9 + $0x8] sm:$0xf]
        %v289 = vld [vmem:[#allocation9 + $0xc] sm:$0xf]
        %v290 = vld [vmem:[#allocation9 + $0x10] sm:$0xf]
        %v291 = vld [vmem:[#allocation9 + $0x14] sm:$0xf]
        %v292 = vld [vmem:[#allocation9 + $0x18] sm:$0xf]
        %v293 = vld [vmem:[#allocation9 + $0x1c] sm:$0xf]
        %v294 = vld [vmem:[#allocation9 + $0x20] sm:$0xf]
        %v295 = vld [vmem:[#allocation9 + $0x24] sm:$0xf]
        %v296 = vld [vmem:[#allocation9 + $0x28] sm:$0xf]
        %v297 = vld [vmem:[#allocation9 + $0x2c] sm:$0xf]
        %v298 = vld [vmem:[#allocation9 + $0x30] sm:$0xf]
        %v299 = vld [vmem:[#allocation9 + $0x34] sm:$0xf]
        %v300 = vld [vmem:[#allocation9 + $0x38] sm:$0xf]
        %v301 = vld [vmem:[#allocation9 + $0x3c] sm:$0xf]
        %v318 = vunpack.c.l.b16 %v270
        %v319 = vunpack.c.l.b16 %v271
        %v320 = vunpack.c.l.b16 %v272
        %v321 = vunpack.c.l.b16 %v273
        %v322 = vunpack.c.l.b16 %v274
        %v323 = vunpack.c.l.b16 %v275
        %v324 = vunpack.c.l.b16 %v276
        %v325 = vunpack.c.l.b16 %v277
        %v326 = vunpack.c.l.b16 %v278
        %v327 = vunpack.c.l.b16 %v279
        %v328 = vunpack.c.l.b16 %v280
        %v329 = vunpack.c.l.b16 %v281
        %v330 = vunpack.c.l.b16 %v282
        %v331 = vunpack.c.l.b16 %v283
        %v332 = vunpack.c.l.b16 %v284
        %v333 = vunpack.c.l.b16 %v285
        %v334 = vpack.c.b16 %v319, %v318
        %v335 = vpack.c.b16 %v321, %v320
        %v336 = vpack.c.b16 %v323, %v322
        %v337 = vpack.c.b16 %v325, %v324
        %v338 = vpack.c.b16 %v327, %v326
        %v339 = vpack.c.b16 %v329, %v328
        %v340 = vpack.c.b16 %v331, %v330
        %v341 = vpack.c.b16 %v333, %v332
        %v366 = vunpack.c.l.b16 %v286
        %v367 = vunpack.c.l.b16 %v287
        %v368 = vunpack.c.l.b16 %v288
        %v369 = vunpack.c.l.b16 %v289
        %v370 = vunpack.c.l.b16 %v290
        %v371 = vunpack.c.l.b16 %v291
        %v372 = vunpack.c.l.b16 %v292
        %v373 = vunpack.c.l.b16 %v293
        %v374 = vunpack.c.l.b16 %v294
        %v375 = vunpack.c.l.b16 %v295
        %v376 = vunpack.c.l.b16 %v296
        %v377 = vunpack.c.l.b16 %v297
        %v378 = vunpack.c.l.b16 %v298
        %v379 = vunpack.c.l.b16 %v299
        %v380 = vunpack.c.l.b16 %v300
        %v381 = vunpack.c.l.b16 %v301
        %v382 = vpack.c.b16 %v367, %v366
        %v383 = vpack.c.b16 %v369, %v368
        %v384 = vpack.c.b16 %v371, %v370
        %v385 = vpack.c.b16 %v373, %v372
        %v386 = vpack.c.b16 %v375, %v374
        %v387 = vpack.c.b16 %v377, %v376
        %v388 = vpack.c.b16 %v379, %v378
        %v389 = vpack.c.b16 %v381, %v380
        %398 = vmatprep.subr.bf16.mxu0 0
        %399 = vmatpush1.bf16.msra.mxu0 %v382
        %400 = vmatprep.subr.bf16.mxu0 0
        %401 = vmatpush1.bf16.msra.mxu0 %v383
        %402 = vmatprep.subr.bf16.mxu0 0
        %403 = vmatpush1.bf16.msra.mxu0 %v384
        %404 = vmatprep.subr.bf16.mxu0 0
        %405 = vmatpush1.bf16.msra.mxu0 %v385
        %406 = vmatprep.subr.bf16.mxu0 0
        %407 = vmatpush1.bf16.msra.mxu0 %v386
        %408 = vmatprep.subr.bf16.mxu0 0
        %409 = vmatpush1.bf16.msra.mxu0 %v387
        %410 = vmatprep.subr.bf16.mxu0 0
        %411 = vmatpush1.bf16.msra.mxu0 %v388
        %412 = vmatprep.subr.bf16.mxu0 0
        %413 = vmatpush1.bf16.msra.mxu0 %v389
        %414 = vmatprep.subr.bf16.mxu0 0
        %415 = vmatpush1.bf16.msra.mxu0 0
        %416 = vmatprep.subr.bf16.mxu0 0
        %417 = vmatpush1.bf16.msra.mxu0 0
        %418 = vmatprep.subr.bf16.mxu0 0
        %419 = vmatpush1.bf16.msra.mxu0 0
        %420 = vmatprep.subr.bf16.mxu0 0
        %421 = vmatpush1.bf16.msra.mxu0 0
        %422 = vmatprep.subr.bf16.mxu0 0
        %423 = vmatpush1.bf16.msra.mxu0 0
        %424 = vmatprep.subr.bf16.mxu0 0
        %425 = vmatpush1.bf16.msra.mxu0 0
        %426 = vmatprep.subr.bf16.mxu0 0
        %427 = vmatpush1.bf16.msra.mxu0 0
        %428 = vmatprep.subr.bf16.mxu0 0
        %429 = vmatpush1.bf16.msra.mxu0 0
        %430 = vmatprep.mubr.bf16.mxu0 0
        %431 = vmatmul.mubr.bf16.gmra.mrb[0].mxu0 %v334
        %v432 = vpop.f32.mrb[0].mxu0
        %v433 = vadd.f32 0.0, %v432
        %v434 = vpop.f32.mrb[0].mxu0
        %v435 = vpop.f32.mrb[0].mxu0
        %v436 = vadd.f32 0.0, %v435
        %v437 = vpop.f32.mrb[0].mxu0
        %438 = vmatprep.mubr.bf16.mxu0 0
        %439 = vmatmul.mubr.bf16.gmra.mrb[0].mxu0 %v335
        %v440 = vpop.f32.mrb[0].mxu0
        %v441 = vadd.f32 0.0, %v440
        %v442 = vpop.f32.mrb[0].mxu0
        %v443 = vpop.f32.mrb[0].mxu0
        %v444 = vadd.f32 0.0, %v443
        %v445 = vpop.f32.mrb[0].mxu0
        %446 = vmatprep.mubr.bf16.mxu0 0
        %447 = vmatmul.mubr.bf16.gmra.mrb[0].mxu0 %v336
        %v448 = vpop.f32.mrb[0].mxu0
        %v449 = vadd.f32 0.0, %v448
        %v450 = vpop.f32.mrb[0].mxu0
        %v451 = vpop.f32.mrb[0].mxu0
        %v452 = vadd.f32 0.0, %v451
        %v453 = vpop.f32.mrb[0].mxu0
        %454 = vmatprep.mubr.bf16.mxu0 0
        %455 = vmatmul.mubr.bf16.gmra.mrb[0].mxu0 %v337
        %v456 = vpop.f32.mrb[0].mxu0
        %v457 = vadd.f32 0.0, %v456
        %v458 = vpop.f32.mrb[0].mxu0
        %v459 = vpop.f32.mrb[0].mxu0
        %v460 = vadd.f32 0.0, %v459
        %v461 = vpop.f32.mrb[0].mxu0
        %462 = vmatprep.mubr.bf16.mxu0 0
        %463 = vmatmul.mubr.bf16.gmra.mrb[0].mxu0 %v338
        %v464 = vpop.f32.mrb[0].mxu0
        %v465 = vadd.f32 0.0, %v464
        %v466 = vpop.f32.mrb[0].mxu0
        %v467 = vpop.f32.mrb[0].mxu0
        %v468 = vadd.f32 0.0, %v467
        %v469 = vpop.f32.mrb[0].mxu0
        %470 = vmatprep.mubr.bf16.mxu0 0
        %471 = vmatmul.mubr.bf16.gmra.mrb[0].mxu0 %v339
        %v472 = vpop.f32.mrb[0].mxu0
        %v473 = vadd.f32 0.0, %v472
        %v474 = vpop.f32.mrb[0].mxu0
        %v475 = vpop.f32.mrb[0].mxu0
        %v476 = vadd.f32 0.0, %v475
        %v477 = vpop.f32.mrb[0].mxu0
        %478 = vmatprep.mubr.bf16.mxu0 0
        %479 = vmatmul.mubr.bf16.gmra.mrb[0].mxu0 %v340
        %v480 = vpop.f32.mrb[0].mxu0
        %v481 = vadd.f32 0.0, %v480
        %v482 = vpop.f32.mrb[0].mxu0
        %v483 = vpop.f32.mrb[0].mxu0
        %v484 = vadd.f32 0.0, %v483
        %v485 = vpop.f32.mrb[0].mxu0
        %486 = vmatprep.mubr.bf16.mxu0 0
        %487 = vmatmul.mubr.bf16.gmra.mrb[0].mxu0 %v341
        %v488 = vpop.f32.mrb[0].mxu0
        %v489 = vadd.f32 0.0, %v488
        %v490 = vpop.f32.mrb[0].mxu0
        %v491 = vpop.f32.mrb[0].mxu0
        %v492 = vadd.f32 0.0, %v491
        %v493 = vpop.f32.mrb[0].mxu0
        %494 = vdwg.mxu0
        %v495 = vld [vmem:[%s228] sm:$0xf]
        %v496 = vunpack.c.l.bf16 %v495
        %v497 = vld [vmem:[#allocation2] sm:$0xff]
        %v498 = vlaneseq
        %v499 = vshrl.u32 %v498, 7
        %v500 = vsub.s32 0, %v499
        %v501 = vrot.slane %v496, %v500
        %503 = vbcast.lane.b32.xlu0 %v501, 256
        %v504 = vpop.permute.xlu0 %503
        %s506 = sor.u32 256, 8
        %507 = vbcast.lane.b32.xlu0 %v501, %s506
        %v508 = vpop.permute.xlu0 %507
        %v509 = vlaneseq
        %v510 = vshrl.u32 %v509, 7
        %v511 = vsub.s32 1, %v510
        %v512 = vrot.slane %v496, %v511
        %514 = vbcast.lane.b32.xlu0 %v512, 256
        %v515 = vpop.permute.xlu0 %514
        %s517 = sor.u32 256, 8
        %518 = vbcast.lane.b32.xlu0 %v512, %s517
        %v519 = vpop.permute.xlu0 %518
        %v520 = vlaneseq
        %v521 = vshrl.u32 %v520, 7
        %v522 = vsub.s32 2, %v521
        %v523 = vrot.slane %v496, %v522
        %525 = vbcast.lane.b32.xlu0 %v523, 256
        %v526 = vpop.permute.xlu0 %525
        %s528 = sor.u32 256, 8
        %529 = vbcast.lane.b32.xlu0 %v523, %s528
        %v530 = vpop.permute.xlu0 %529
        %v531 = vlaneseq
        %v532 = vshrl.u32 %v531, 7
        %v533 = vsub.s32 3, %v532
        %v534 = vrot.slane %v496, %v533
        %536 = vbcast.lane.b32.xlu0 %v534, 256
        %v537 = vpop.permute.xlu0 %536
        %s539 = sor.u32 256, 8
        %540 = vbcast.lane.b32.xlu0 %v534, %s539
        %v541 = vpop.permute.xlu0 %540
        %v542 = vlaneseq
        %v543 = vshrl.u32 %v542, 7
        %v544 = vsub.s32 4, %v543
        %v545 = vrot.slane %v496, %v544
        %547 = vbcast.lane.b32.xlu0 %v545, 256
        %v548 = vpop.permute.xlu0 %547
        %s550 = sor.u32 256, 8
        %551 = vbcast.lane.b32.xlu0 %v545, %s550
        %v552 = vpop.permute.xlu0 %551
        %v553 = vlaneseq
        %v554 = vshrl.u32 %v553, 7
        %v555 = vsub.s32 5, %v554
        %v556 = vrot.slane %v496, %v555
        %558 = vbcast.lane.b32.xlu0 %v556, 256
        %v559 = vpop.permute.xlu0 %558
        %s561 = sor.u32 256, 8
        %562 = vbcast.lane.b32.xlu0 %v556, %s561
        %v563 = vpop.permute.xlu0 %562
        %v564 = vlaneseq
        %v565 = vshrl.u32 %v564, 7
        %v566 = vsub.s32 6, %v565
        %v567 = vrot.slane %v496, %v566
        %569 = vbcast.lane.b32.xlu0 %v567, 256
        %v570 = vpop.permute.xlu0 %569
        %s572 = sor.u32 256, 8
        %573 = vbcast.lane.b32.xlu0 %v567, %s572
        %v574 = vpop.permute.xlu0 %573
        %v575 = vlaneseq
        %v576 = vshrl.u32 %v575, 7
        %v577 = vsub.s32 7, %v576
        %v578 = vrot.slane %v496, %v577
        %580 = vbcast.lane.b32.xlu0 %v578, 256
        %v581 = vpop.permute.xlu0 %580
        %s583 = sor.u32 256, 8
        %584 = vbcast.lane.b32.xlu0 %v578, %s583
        %v585 = vpop.permute.xlu0 %584
        %v586 = vmul.f32 %v433, %v504
        %v587 = vmul.f32 %v436, %v508
        %v588 = vmul.f32 %v441, %v515
        %v589 = vmul.f32 %v444, %v519
        %v590 = vmul.f32 %v449, %v526
        %v591 = vmul.f32 %v452, %v530
        %v592 = vmul.f32 %v457, %v537
        %v593 = vmul.f32 %v460, %v541
        %v594 = vmul.f32 %v465, %v548
        %v595 = vmul.f32 %v468, %v552
        %v596 = vmul.f32 %v473, %v559
        %v597 = vmul.f32 %v476, %v563
        %v598 = vmul.f32 %v481, %v570
        %v599 = vmul.f32 %v484, %v574
        %v600 = vmul.f32 %v489, %v581
        %v601 = vmul.f32 %v492, %v585
        %v602 = vadd.f32 %v586, %v587
        %v603 = vrot.slane %v602, 4
        %v604 = vadd.f32 %v602, %v603
        %v605 = vrot.slane %v604, 2
        %v606 = vadd.f32 %v604, %v605
        %v607 = vrot.slane %v606, 1
        %v608 = vadd.f32 %v606, %v607
        %v609 = vadd.f32 %v588, %v589
        %v610 = vrot.slane %v609, 4
        %v611 = vadd.f32 %v609, %v610
        %v612 = vrot.slane %v611, 2
        %v613 = vadd.f32 %v611, %v612
        %v614 = vrot.slane %v613, 1
        %v615 = vadd.f32 %v613, %v614
        %v616 = vadd.f32 %v590, %v591
        %v617 = vrot.slane %v616, 4
        %v618 = vadd.f32 %v616, %v617
        %v619 = vrot.slane %v618, 2
        %v620 = vadd.f32 %v618, %v619
        %v621 = vrot.slane %v620, 1
        %v622 = vadd.f32 %v620, %v621
        %v623 = vadd.f32 %v592, %v593
        %v624 = vrot.slane %v623, 4
        %v625 = vadd.f32 %v623, %v624
        %v626 = vrot.slane %v625, 2
        %v627 = vadd.f32 %v625, %v626
        %v628 = vrot.slane %v627, 1
        %v629 = vadd.f32 %v627, %v628
        %v630 = vadd.f32 %v594, %v595
        %v631 = vrot.slane %v630, 4
        %v632 = vadd.f32 %v630, %v631
        %v633 = vrot.slane %v632, 2
        %v634 = vadd.f32 %v632, %v633
        %v635 = vrot.slane %v634, 1
        %v636 = vadd.f32 %v634, %v635
        %v637 = vadd.f32 %v596, %v597
        %v638 = vrot.slane %v637, 4
        %v639 = vadd.f32 %v637, %v638
        %v640 = vrot.slane %v639, 2
        %v641 = vadd.f32 %v639, %v640
        %v642 = vrot.slane %v641, 1
        %v643 = vadd.f32 %v641, %v642
        %v644 = vadd.f32 %v598, %v599
        %v645 = vrot.slane %v644, 4
        %v646 = vadd.f32 %v644, %v645
        %v647 = vrot.slane %v646, 2
        %v648 = vadd.f32 %v646, %v647
        %v649 = vrot.slane %v648, 1
        %v650 = vadd.f32 %v648, %v649
        %v651 = vadd.f32 %v600, %v601
        %v652 = vrot.slane %v651, 4
        %v653 = vadd.f32 %v651, %v652
        %v654 = vrot.slane %v653, 2
        %v655 = vadd.f32 %v653, %v654
        %v656 = vrot.slane %v655, 1
        %v657 = vadd.f32 %v655, %v656
        %vm666 = vcmask 1041409
        %v667 = vsel %vm666, %v615, %v608
        %vm668 = vcmask 1042434
        %v669 = vsel %vm668, %v622, %v667
        %vm670 = vcmask 1043459
        %v671 = vsel %vm670, %v629, %v669
        %vm672 = vcmask 1044484
        %v673 = vsel %vm672, %v636, %v671
        %vm674 = vcmask 1045509
        %v675 = vsel %vm674, %v643, %v673
        %vm676 = vcmask 1046534
        %v677 = vsel %vm676, %v650, %v675
        %vm678 = vcmask 1047559
        %v679 = vsel %vm678, %v657, %v677
        %v681 = vadd.f32 %v497, %v679
        %682 = vst [vmem:[#allocation2] sm:$0xff] %v681
        %v683 = vld [vmem:[#allocation3] sm:$0xff]
        %vm684 = vcmask 130048
        %v685 = vsel %vm684, %v496, 0.0
        %686 = vadd.xlane.f32.xlu0 %v685
        %v687 = vpop.xlane.xlu0 %686
        %v688 = vadd.f32 %v683, %v687
        %vm689 = vcmask 7168
        %690 = vst.msk [vmem:[#allocation3] sm:$0xff] %vm689, %v688
        // Predicated region
        $region49: #{tpu_custom_call.1} parent=31 // pred_check
          %p691 = pneg %p263
        $region50: #{tpu_custom_call.1} parent=31 // pred_check_branch
          %693 = sbr.rel (%p691) target = $region52
        $region51: #{tpu_custom_call.1} parent=31 // pred_region
          %v694 = vld [vmem:[#allocation3] sm:$0xff]
          %v695 = vmax.f32 %v694, 1.0
          %v696 = vld [vmem:[#allocation2] sm:$0xff]
          %v697 = vrcp.pop %v695
          %699 = vset.pattern.permute.xlu0 0
          %700 = vperm.xlu0 %699, %v697
          %v701 = vpop.permute.xlu0 %700
          %v703 = vmul.f32 %v696, %v701
          %704 = vst [vmem:[%s259] sm:$0xff] %v703
        $region52: #{tpu_custom_call.1} parent=31 // pred_fallthru
          _
        %s705 = sand.u32 %s120, 1
        %s706 = scalar_lea.sflag [#allocation6], %s705
        %s707 = sand.u32 %s120, 1
        %s708 = smul.addr %s707, 8
        %s709 = scalar_lea.vmem [#allocation10], %s708
        // Predicated region
        $region53: #{tpu_custom_call.1} parent=31 // pred_check
          %p710 = pneg %p130
        $region54: #{tpu_custom_call.1} parent=31 // pred_check_branch
          %712 = sbr.rel (%p710) target = $region56
        $region55: #{tpu_custom_call.1} parent=31 // pred_region
          %s714 = ssub.s32 128, 128
          %715 = vsyncadd %s706, %s714
          %s716 = smul.addr %s27, 128
          %s717 = scalar_lea.hbm %s3, %s716
          %s719 = sshll.u32 %s709, 4
          %s720 = int_to_ptr.vmem [resolvable:$true] %s719
          %722 = dma.vmem_to_hbm [thread:$0]  %s720, 128, %s717, %s706
        $region56: #{tpu_custom_call.1} parent=31 // pred_fallthru
          _
      $region32: #{tpu_custom_call.1} parent=5 // pred_fallthru
        _
      %p723 = scmp.le.s32.totalorder 2, %s18
      // Predicated region
      $region57: #{tpu_custom_call.1} parent=5 // pred_check
        %p724 = pneg %p723
      $region58: #{tpu_custom_call.1} parent=5 // pred_check_branch
        %726 = sbr.rel (%p724) target = $region60
      $region59: #{tpu_custom_call.1} parent=5 // pred_region
        %s727 = ssub.s32 %s18, 2
        // Predicated region
        $region61: #{tpu_custom_call.1} parent=59 // pred_check
          %p728 = pneg %p136
        $region62: #{tpu_custom_call.1} parent=59 // pred_check_branch
          %730 = sbr.rel (%p728) target = $region64
        $region63: #{tpu_custom_call.1} parent=59 // pred_region
          %s731 = sand.u32 %s121, 1
          %s732 = scalar_lea.sflag [#allocation6], %s731
          %s733 = sand.u32 %s121, 1
          %s734 = smul.addr %s733, 8
          %s735 = scalar_lea.vmem [#allocation10], %s734
          %736 = dma.done %s732, 128
        $region64: #{tpu_custom_call.1} parent=59 // pred_fallthru
          _
      $region60: #{tpu_custom_call.1} parent=5 // pred_fallthru
        _
    $region6: #{tpu_custom_call.1} parent=1 // loop_footer
      %s22 = sadd.s32 1, %s18
    $region7: #{tpu_custom_call.1} parent=1 // loop_footer_branch
      %17 = sbr.rel target = $region3
    $region8: #{tpu_custom_call.1} parent=1 // loop_exit
      _
    %737 = vsyncpa [#allocation5], 1
    %s738 = scalar_lea.sflag [#allocation5], 1
    %739 = vsyncpa %s738, 1
    %740 = vsyncpa [#allocation8], 1
    %s741 = scalar_lea.sflag [#allocation8], 1
    %742 = vsyncpa %s741, 1
    %743 = vsyncpa [#allocation6], 1
    %s744 = scalar_lea.sflag [#allocation6], 1
    %745 = vsyncpa %s744, 1

</llo_original>
